<compile_context>
chip_gen: v7x
topology: tpu7x:2x2x1
jax: 0.10.0
libtpu: 0.0.40
codegen_flags: <defaults>
</compile_context>

<pallas_src>
import jax
import jax.numpy as jnp
from jax import lax
from jax.experimental import pallas as pl
from jax.experimental.pallas import tpu as pltpu


def _cdiv(a, b):
    return -(-a // b)


def _round_up(x, m):
    return _cdiv(x, m) * m


@jax.jit
def posenet_forward(x_nchw, weight_oihw, bias):
    """out = Conv2d(C_in, 2, 3x3, stride=1, pad=1)(x);  NCHW in / NCHW out."""
    N, Cin, H, W = x_nchw.shape
    Cout = weight_oihw.shape[0]

    Hp, Wp = H + 2, W + 2              # logical conv-padded grid (1-px zero ring)
    L = Hp * Wp                        # flattened logical-grid length
    Lacc = _round_up(L, 128)           # lane-dense accumulator / output length
    S = Wp + 1                         # max |flat tap offset|

    # Single pad: rb zero rows above / ra below / 1 zero column each side.
    # rb is chosen so the flat zero margin before the logical grid is >= S,
    # ra so the slab covers the largest tap window of the Lacc computed lanes.
    rb = 1 + _cdiv(S, Wp)
    off0 = (rb - 1) * Wp               # flat offset of the logical grid start
    Hbig = max(H + rb + 1, _cdiv(off0 + S + Lacc, Wp))
    ra = Hbig - H - rb
    Lbig = Hbig * Wp

    xbig = jnp.pad(x_nchw, ((0, 0), (0, 0), (rb, ra), (1, 1)))     # one HBM copy
    x_slab = xbig.reshape(N * Cin, Lbig).astype(jnp.float32)        # free reshape
    w_flat = weight_oihw.reshape(-1).astype(jnp.float32)            # (Cout*Cin*9,)
    b_flat = bias.astype(jnp.float32)                               # (Cout,)

    def kernel(x_ref, w_ref, b_ref, o_ref):
        # x_ref: (N*Cin, Lbig) VMEM   w_ref: (Cout*Cin*9,) SMEM
        # b_ref: (Cout,) SMEM         o_ref: (N*Cout, Lacc) VMEM
        xv = x_ref[...]                                   # one lane-dense load
        taps = []                                         # 9 lane windows, all rows
        for kh in range(3):
            for kw in range(3):
                s = off0 + (kh - 1) * Wp + (kw - 1)
                taps.append(xv[:, s:s + Lacc])            # (N*Cin, Lacc)
        rows = []
        for n in range(N):
            accs = [jnp.full((1, Lacc), b_ref[co], jnp.float32)     # bias init
                    for co in range(Cout)]
            for ci in range(Cin):
                r = n * Cin + ci
                for k in range(9):
                    t = taps[k][r:r + 1, :]               # (1, Lacc) tap row
                    for co in range(Cout):
                        w = w_ref[(co * Cin + ci) * 9 + k]          # SMEM scalar
                        accs[co] = accs[co] + w * t                 # VPU FMA
            rows.extend(accs)
        o_ref[...] = jnp.concatenate(rows, axis=0).astype(o_ref.dtype)

    out_slab = pl.pallas_call(
        kernel,
        out_shape=jax.ShapeDtypeStruct((N * Cout, Lacc), jnp.float32),
        in_specs=[
            pl.BlockSpec(memory_space=pltpu.MemorySpace.VMEM),   # activation slab
            pl.BlockSpec(memory_space=pltpu.MemorySpace.SMEM),   # weights (72,)
            pl.BlockSpec(memory_space=pltpu.MemorySpace.SMEM),   # bias (2,)
        ],
        out_specs=pl.BlockSpec(memory_space=pltpu.MemorySpace.VMEM),
    )(x_slab, w_flat, b_flat)

    # TODO(synk): for large H*W (or large Cin) add a spatial-tile grid axis
    # (128-multiple tiles with a 2*(Wp+1) halo, marked "parallel") sized for
    # v7x's 64 MiB VMEM so both TensorCores are fed, and switch the tap
    # accumulation to one fused K=Cin*9 MXU dot; at 16x16 a single step on one
    # core is strictly faster.

    # Drop lane-padding tail, map back onto the logical padded grid, keep interior.
    out = out_slab.reshape(N, Cout, Lacc)[:, :, :L]
    out = out.reshape(N, Cout, Hp, Wp)[:, :, 1:H + 1, 1:W + 1]
    return out


def _reference_conv(x_nchw, weight_oihw, bias):
    # Pure-JAX reference (XLA conv) for correctness checking.
    out = lax.conv_general_dilated(
        x_nchw, weight_oihw,
        window_strides=(1, 1), padding=((1, 1), (1, 1)),
        dimension_numbers=("NCHW", "OIHW", "NCHW"))
    return out + bias.reshape(1, -1, 1, 1)


if __name__ == "__main__":
    key = jax.random.PRNGKey(0)
    k_x, k_w, k_b = jax.random.split(key, 3)

    N, C_in, H, W = 2, 4, 16, 16
    C_out = 2

    x = jax.random.normal(k_x, (N, C_in, H, W), dtype=jnp.float32)
    # Deterministic synthetic parameters (shapes match nn.Conv2d(C_in, 2, 3, 1, 1)).
    fan_in = C_in * 3 * 3
    bound = 1.0 / (fan_in ** 0.5)
    weight = jax.random.uniform(k_w, (C_out, C_in, 3, 3),
                                minval=-bound, maxval=bound, dtype=jnp.float32)
    bias = jax.random.uniform(k_b, (C_out,),
                              minval=-bound, maxval=bound, dtype=jnp.float32)

    out = jax.block_until_ready(posenet_forward(x, weight, bias))
    ref = jax.block_until_ready(_reference_conv(x, weight, bias))

    assert out.shape == (N, C_out, H, W), out.shape
    assert jnp.allclose(out, ref, atol=1e-4, rtol=1e-4), "mismatch vs reference conv"

    print("KERNEL_OK")
</pallas_src>

<mosaic_0001>
module attributes {stable_mosaic.version = 11 : i64} {
  func.func @kernel(%arg0: memref<8x450xf32, #tpu.memory_space<vmem>>, %arg1: memref<72xf32, #tpu.memory_space<smem>>, %arg2: memref<2xf32, #tpu.memory_space<smem>>, %arg3: memref<4x384xf32, #tpu.memory_space<vmem>>) attributes {dimension_semantics = [], scalar_prefetch = 0 : i64, scratch_operands = 0 : i64, tpu.core_type = #tpu.core_type<tc>} {
    %c0 = arith.constant 0 : index
    %c0_0 = arith.constant 0 : index
    %0 = vector.load %arg0[%c0, %c0_0] : memref<8x450xf32, #tpu.memory_space<vmem>>, vector<8x450xf32>
    %1 = vector.extract_strided_slice %0 {offsets = [0, 17], sizes = [8, 384], strides = [1, 1]} : vector<8x450xf32> to vector<8x384xf32>
    %2 = vector.extract_strided_slice %0 {offsets = [0, 18], sizes = [8, 384], strides = [1, 1]} : vector<8x450xf32> to vector<8x384xf32>
    %3 = vector.extract_strided_slice %0 {offsets = [0, 19], sizes = [8, 384], strides = [1, 1]} : vector<8x450xf32> to vector<8x384xf32>
    %4 = vector.extract_strided_slice %0 {offsets = [0, 35], sizes = [8, 384], strides = [1, 1]} : vector<8x450xf32> to vector<8x384xf32>
    %5 = vector.extract_strided_slice %0 {offsets = [0, 36], sizes = [8, 384], strides = [1, 1]} : vector<8x450xf32> to vector<8x384xf32>
    %6 = vector.extract_strided_slice %0 {offsets = [0, 37], sizes = [8, 384], strides = [1, 1]} : vector<8x450xf32> to vector<8x384xf32>
    %7 = vector.extract_strided_slice %0 {offsets = [0, 53], sizes = [8, 384], strides = [1, 1]} : vector<8x450xf32> to vector<8x384xf32>
    %8 = vector.extract_strided_slice %0 {offsets = [0, 54], sizes = [8, 384], strides = [1, 1]} : vector<8x450xf32> to vector<8x384xf32>
    %9 = vector.extract_strided_slice %0 {offsets = [0, 55], sizes = [8, 384], strides = [1, 1]} : vector<8x450xf32> to vector<8x384xf32>
    %c0_1 = arith.constant 0 : index
    %10 = memref.load %arg2[%c0_1] : memref<2xf32, #tpu.memory_space<smem>>
    %11 = vector.broadcast %10 : f32 to vector<1x384xf32>
    %c1 = arith.constant 1 : index
    %12 = memref.load %arg2[%c1] : memref<2xf32, #tpu.memory_space<smem>>
    %13 = vector.broadcast %12 : f32 to vector<1x384xf32>
    %14 = vector.extract_strided_slice %1 {offsets = [0, 0], sizes = [1, 384], strides = [1, 1]} : vector<8x384xf32> to vector<1x384xf32>
    %c0_2 = arith.constant 0 : index
    %15 = memref.load %arg1[%c0_2] : memref<72xf32, #tpu.memory_space<smem>>
    %16 = vector.broadcast %15 : f32 to vector<1x384xf32>
    %17 = arith.mulf %16, %14 : vector<1x384xf32>
    %18 = arith.addf %11, %17 : vector<1x384xf32>
    %c36 = arith.constant 36 : index
    %19 = memref.load %arg1[%c36] : memref<72xf32, #tpu.memory_space<smem>>
    %20 = vector.broadcast %19 : f32 to vector<1x384xf32>
    %21 = arith.mulf %20, %14 : vector<1x384xf32>
    %22 = arith.addf %13, %21 : vector<1x384xf32>
    %23 = vector.extract_strided_slice %2 {offsets = [0, 0], sizes = [1, 384], strides = [1, 1]} : vector<8x384xf32> to vector<1x384xf32>
    %c1_3 = arith.constant 1 : index
    %24 = memref.load %arg1[%c1_3] : memref<72xf32, #tpu.memory_space<smem>>
    %25 = vector.broadcast %24 : f32 to vector<1x384xf32>
    %26 = arith.mulf %25, %23 : vector<1x384xf32>
    %27 = arith.addf %18, %26 : vector<1x384xf32>
    %c37 = arith.constant 37 : index
    %28 = memref.load %arg1[%c37] : memref<72xf32, #tpu.memory_space<smem>>
    %29 = vector.broadcast %28 : f32 to vector<1x384xf32>
    %30 = arith.mulf %29, %23 : vector<1x384xf32>
    %31 = arith.addf %22, %30 : vector<1x384xf32>
    %32 = vector.extract_strided_slice %3 {offsets = [0, 0], sizes = [1, 384], strides = [1, 1]} : vector<8x384xf32> to vector<1x384xf32>
    %c2 = arith.constant 2 : index
    %33 = memref.load %arg1[%c2] : memref<72xf32, #tpu.memory_space<smem>>
    %34 = vector.broadcast %33 : f32 to vector<1x384xf32>
    %35 = arith.mulf %34, %32 : vector<1x384xf32>
    %36 = arith.addf %27, %35 : vector<1x384xf32>
    %c38 = arith.constant 38 : index
    %37 = memref.load %arg1[%c38] : memref<72xf32, #tpu.memory_space<smem>>
    %38 = vector.broadcast %37 : f32 to vector<1x384xf32>
    %39 = arith.mulf %38, %32 : vector<1x384xf32>
    %40 = arith.addf %31, %39 : vector<1x384xf32>
    %41 = vector.extract_strided_slice %4 {offsets = [0, 0], sizes = [1, 384], strides = [1, 1]} : vector<8x384xf32> to vector<1x384xf32>
    %c3 = arith.constant 3 : index
    %42 = memref.load %arg1[%c3] : memref<72xf32, #tpu.memory_space<smem>>
    %43 = vector.broadcast %42 : f32 to vector<1x384xf32>
    %44 = arith.mulf %43, %41 : vector<1x384xf32>
    %45 = arith.addf %36, %44 : vector<1x384xf32>
    %c39 = arith.constant 39 : index
    %46 = memref.load %arg1[%c39] : memref<72xf32, #tpu.memory_space<smem>>
    %47 = vector.broadcast %46 : f32 to vector<1x384xf32>
    %48 = arith.mulf %47, %41 : vector<1x384xf32>
    %49 = arith.addf %40, %48 : vector<1x384xf32>
    %50 = vector.extract_strided_slice %5 {offsets = [0, 0], sizes = [1, 384], strides = [1, 1]} : vector<8x384xf32> to vector<1x384xf32>
    %c4 = arith.constant 4 : index
    %51 = memref.load %arg1[%c4] : memref<72xf32, #tpu.memory_space<smem>>
    %52 = vector.broadcast %51 : f32 to vector<1x384xf32>
    %53 = arith.mulf %52, %50 : vector<1x384xf32>
    %54 = arith.addf %45, %53 : vector<1x384xf32>
    %c40 = arith.constant 40 : index
    %55 = memref.load %arg1[%c40] : memref<72xf32, #tpu.memory_space<smem>>
    %56 = vector.broadcast %55 : f32 to vector<1x384xf32>
    %57 = arith.mulf %56, %50 : vector<1x384xf32>
    %58 = arith.addf %49, %57 : vector<1x384xf32>
    %59 = vector.extract_strided_slice %6 {offsets = [0, 0], sizes = [1, 384], strides = [1, 1]} : vector<8x384xf32> to vector<1x384xf32>
    %c5 = arith.constant 5 : index
    %60 = memref.load %arg1[%c5] : memref<72xf32, #tpu.memory_space<smem>>
    %61 = vector.broadcast %60 : f32 to vector<1x384xf32>
    %62 = arith.mulf %61, %59 : vector<1x384xf32>
    %63 = arith.addf %54, %62 : vector<1x384xf32>
    %c41 = arith.constant 41 : index
    %64 = memref.load %arg1[%c41] : memref<72xf32, #tpu.memory_space<smem>>
    %65 = vector.broadcast %64 : f32 to vector<1x384xf32>
    %66 = arith.mulf %65, %59 : vector<1x384xf32>
    %67 = arith.addf %58, %66 : vector<1x384xf32>
    %68 = vector.extract_strided_slice %7 {offsets = [0, 0], sizes = [1, 384], strides = [1, 1]} : vector<8x384xf32> to vector<1x384xf32>
    %c6 = arith.constant 6 : index
    %69 = memref.load %arg1[%c6] : memref<72xf32, #tpu.memory_space<smem>>
    %70 = vector.broadcast %69 : f32 to vector<1x384xf32>
    %71 = arith.mulf %70, %68 : vector<1x384xf32>
    %72 = arith.addf %63, %71 : vector<1x384xf32>
    %c42 = arith.constant 42 : index
    %73 = memref.load %arg1[%c42] : memref<72xf32, #tpu.memory_space<smem>>
    %74 = vector.broadcast %73 : f32 to vector<1x384xf32>
    %75 = arith.mulf %74, %68 : vector<1x384xf32>
    %76 = arith.addf %67, %75 : vector<1x384xf32>
    %77 = vector.extract_strided_slice %8 {offsets = [0, 0], sizes = [1, 384], strides = [1, 1]} : vector<8x384xf32> to vector<1x384xf32>
    %c7 = arith.constant 7 : index
    %78 = memref.load %arg1[%c7] : memref<72xf32, #tpu.memory_space<smem>>
    %79 = vector.broadcast %78 : f32 to vector<1x384xf32>
    %80 = arith.mulf %79, %77 : vector<1x384xf32>
    %81 = arith.addf %72, %80 : vector<1x384xf32>
    %c43 = arith.constant 43 : index
    %82 = memref.load %arg1[%c43] : memref<72xf32, #tpu.memory_space<smem>>
    %83 = vector.broadcast %82 : f32 to vector<1x384xf32>
    %84 = arith.mulf %83, %77 : vector<1x384xf32>
    %85 = arith.addf %76, %84 : vector<1x384xf32>
    %86 = vector.extract_strided_slice %9 {offsets = [0, 0], sizes = [1, 384], strides = [1, 1]} : vector<8x384xf32> to vector<1x384xf32>
    %c8 = arith.constant 8 : index
    %87 = memref.load %arg1[%c8] : memref<72xf32, #tpu.memory_space<smem>>
    %88 = vector.broadcast %87 : f32 to vector<1x384xf32>
    %89 = arith.mulf %88, %86 : vector<1x384xf32>
    %90 = arith.addf %81, %89 : vector<1x384xf32>
    %c44 = arith.constant 44 : index
    %91 = memref.load %arg1[%c44] : memref<72xf32, #tpu.memory_space<smem>>
    %92 = vector.broadcast %91 : f32 to vector<1x384xf32>
    %93 = arith.mulf %92, %86 : vector<1x384xf32>
    %94 = arith.addf %85, %93 : vector<1x384xf32>
    %95 = vector.extract_strided_slice %1 {offsets = [1, 0], sizes = [1, 384], strides = [1, 1]} : vector<8x384xf32> to vector<1x384xf32>
    %c9 = arith.constant 9 : index
    %96 = memref.load %arg1[%c9] : memref<72xf32, #tpu.memory_space<smem>>
    %97 = vector.broadcast %96 : f32 to vector<1x384xf32>
    %98 = arith.mulf %97, %95 : vector<1x384xf32>
    %99 = arith.addf %90, %98 : vector<1x384xf32>
    %c45 = arith.constant 45 : index
    %100 = memref.load %arg1[%c45] : memref<72xf32, #tpu.memory_space<smem>>
    %101 = vector.broadcast %100 : f32 to vector<1x384xf32>
    %102 = arith.mulf %101, %95 : vector<1x384xf32>
    %103 = arith.addf %94, %102 : vector<1x384xf32>
    %104 = vector.extract_strided_slice %2 {offsets = [1, 0], sizes = [1, 384], strides = [1, 1]} : vector<8x384xf32> to vector<1x384xf32>
    %c10 = arith.constant 10 : index
    %105 = memref.load %arg1[%c10] : memref<72xf32, #tpu.memory_space<smem>>
    %106 = vector.broadcast %105 : f32 to vector<1x384xf32>
    %107 = arith.mulf %106, %104 : vector<1x384xf32>
    %108 = arith.addf %99, %107 : vector<1x384xf32>
    %c46 = arith.constant 46 : index
    %109 = memref.load %arg1[%c46] : memref<72xf32, #tpu.memory_space<smem>>
    %110 = vector.broadcast %109 : f32 to vector<1x384xf32>
    %111 = arith.mulf %110, %104 : vector<1x384xf32>
    %112 = arith.addf %103, %111 : vector<1x384xf32>
    %113 = vector.extract_strided_slice %3 {offsets = [1, 0], sizes = [1, 384], strides = [1, 1]} : vector<8x384xf32> to vector<1x384xf32>
    %c11 = arith.constant 11 : index
    %114 = memref.load %arg1[%c11] : memref<72xf32, #tpu.memory_space<smem>>
    %115 = vector.broadcast %114 : f32 to vector<1x384xf32>
    %116 = arith.mulf %115, %113 : vector<1x384xf32>
    %117 = arith.addf %108, %116 : vector<1x384xf32>
    %c47 = arith.constant 47 : index
    %118 = memref.load %arg1[%c47] : memref<72xf32, #tpu.memory_space<smem>>
    %119 = vector.broadcast %118 : f32 to vector<1x384xf32>
    %120 = arith.mulf %119, %113 : vector<1x384xf32>
    %121 = arith.addf %112, %120 : vector<1x384xf32>
    %122 = vector.extract_strided_slice %4 {offsets = [1, 0], sizes = [1, 384], strides = [1, 1]} : vector<8x384xf32> to vector<1x384xf32>
    %c12 = arith.constant 12 : index
    %123 = memref.load %arg1[%c12] : memref<72xf32, #tpu.memory_space<smem>>
    %124 = vector.broadcast %123 : f32 to vector<1x384xf32>
    %125 = arith.mulf %124, %122 : vector<1x384xf32>
    %126 = arith.addf %117, %125 : vector<1x384xf32>
    %c48 = arith.constant 48 : index
    %127 = memref.load %arg1[%c48] : memref<72xf32, #tpu.memory_space<smem>>
    %128 = vector.broadcast %127 : f32 to vector<1x384xf32>
    %129 = arith.mulf %128, %122 : vector<1x384xf32>
    %130 = arith.addf %121, %129 : vector<1x384xf32>
    %131 = vector.extract_strided_slice %5 {offsets = [1, 0], sizes = [1, 384], strides = [1, 1]} : vector<8x384xf32> to vector<1x384xf32>
    %c13 = arith.constant 13 : index
    %132 = memref.load %arg1[%c13] : memref<72xf32, #tpu.memory_space<smem>>
    %133 = vector.broadcast %132 : f32 to vector<1x384xf32>
    %134 = arith.mulf %133, %131 : vector<1x384xf32>
    %135 = arith.addf %126, %134 : vector<1x384xf32>
    %c49 = arith.constant 49 : index
    %136 = memref.load %arg1[%c49] : memref<72xf32, #tpu.memory_space<smem>>
    %137 = vector.broadcast %136 : f32 to vector<1x384xf32>
    %138 = arith.mulf %137, %131 : vector<1x384xf32>
    %139 = arith.addf %130, %138 : vector<1x384xf32>
    %140 = vector.extract_strided_slice %6 {offsets = [1, 0], sizes = [1, 384], strides = [1, 1]} : vector<8x384xf32> to vector<1x384xf32>
    %c14 = arith.constant 14 : index
    %141 = memref.load %arg1[%c14] : memref<72xf32, #tpu.memory_space<smem>>
    %142 = vector.broadcast %141 : f32 to vector<1x384xf32>
    %143 = arith.mulf %142, %140 : vector<1x384xf32>
    %144 = arith.addf %135, %143 : vector<1x384xf32>
    %c50 = arith.constant 50 : index
    %145 = memref.load %arg1[%c50] : memref<72xf32, #tpu.memory_space<smem>>
    %146 = vector.broadcast %145 : f32 to vector<1x384xf32>
    %147 = arith.mulf %146, %140 : vector<1x384xf32>
    %148 = arith.addf %139, %147 : vector<1x384xf32>
    %149 = vector.extract_strided_slice %7 {offsets = [1, 0], sizes = [1, 384], strides = [1, 1]} : vector<8x384xf32> to vector<1x384xf32>
    %c15 = arith.constant 15 : index
    %150 = memref.load %arg1[%c15] : memref<72xf32, #tpu.memory_space<smem>>
    %151 = vector.broadcast %150 : f32 to vector<1x384xf32>
    %152 = arith.mulf %151, %149 : vector<1x384xf32>
    %153 = arith.addf %144, %152 : vector<1x384xf32>
    %c51 = arith.constant 51 : index
    %154 = memref.load %arg1[%c51] : memref<72xf32, #tpu.memory_space<smem>>
    %155 = vector.broadcast %154 : f32 to vector<1x384xf32>
    %156 = arith.mulf %155, %149 : vector<1x384xf32>
    %157 = arith.addf %148, %156 : vector<1x384xf32>
    %158 = vector.extract_strided_slice %8 {offsets = [1, 0], sizes = [1, 384], strides = [1, 1]} : vector<8x384xf32> to vector<1x384xf32>
    %c16 = arith.constant 16 : index
    %159 = memref.load %arg1[%c16] : memref<72xf32, #tpu.memory_space<smem>>
    %160 = vector.broadcast %159 : f32 to vector<1x384xf32>
    %161 = arith.mulf %160, %158 : vector<1x384xf32>
    %162 = arith.addf %153, %161 : vector<1x384xf32>
    %c52 = arith.constant 52 : index
    %163 = memref.load %arg1[%c52] : memref<72xf32, #tpu.memory_space<smem>>
    %164 = vector.broadcast %163 : f32 to vector<1x384xf32>
    %165 = arith.mulf %164, %158 : vector<1x384xf32>
    %166 = arith.addf %157, %165 : vector<1x384xf32>
    %167 = vector.extract_strided_slice %9 {offsets = [1, 0], sizes = [1, 384], strides = [1, 1]} : vector<8x384xf32> to vector<1x384xf32>
    %c17 = arith.constant 17 : index
    %168 = memref.load %arg1[%c17] : memref<72xf32, #tpu.memory_space<smem>>
    %169 = vector.broadcast %168 : f32 to vector<1x384xf32>
    %170 = arith.mulf %169, %167 : vector<1x384xf32>
    %171 = arith.addf %162, %170 : vector<1x384xf32>
    %c53 = arith.constant 53 : index
    %172 = memref.load %arg1[%c53] : memref<72xf32, #tpu.memory_space<smem>>
    %173 = vector.broadcast %172 : f32 to vector<1x384xf32>
    %174 = arith.mulf %173, %167 : vector<1x384xf32>
    %175 = arith.addf %166, %174 : vector<1x384xf32>
    %176 = vector.extract_strided_slice %1 {offsets = [2, 0], sizes = [1, 384], strides = [1, 1]} : vector<8x384xf32> to vector<1x384xf32>
    %c18 = arith.constant 18 : index
    %177 = memref.load %arg1[%c18] : memref<72xf32, #tpu.memory_space<smem>>
    %178 = vector.broadcast %177 : f32 to vector<1x384xf32>
    %179 = arith.mulf %178, %176 : vector<1x384xf32>
    %180 = arith.addf %171, %179 : vector<1x384xf32>
    %c54 = arith.constant 54 : index
    %181 = memref.load %arg1[%c54] : memref<72xf32, #tpu.memory_space<smem>>
    %182 = vector.broadcast %181 : f32 to vector<1x384xf32>
    %183 = arith.mulf %182, %176 : vector<1x384xf32>
    %184 = arith.addf %175, %183 : vector<1x384xf32>
    %185 = vector.extract_strided_slice %2 {offsets = [2, 0], sizes = [1, 384], strides = [1, 1]} : vector<8x384xf32> to vector<1x384xf32>
    %c19 = arith.constant 19 : index
    %186 = memref.load %arg1[%c19] : memref<72xf32, #tpu.memory_space<smem>>
    %187 = vector.broadcast %186 : f32 to vector<1x384xf32>
    %188 = arith.mulf %187, %185 : vector<1x384xf32>
    %189 = arith.addf %180, %188 : vector<1x384xf32>
    %c55 = arith.constant 55 : index
    %190 = memref.load %arg1[%c55] : memref<72xf32, #tpu.memory_space<smem>>
    %191 = vector.broadcast %190 : f32 to vector<1x384xf32>
    %192 = arith.mulf %191, %185 : vector<1x384xf32>
    %193 = arith.addf %184, %192 : vector<1x384xf32>
    %194 = vector.extract_strided_slice %3 {offsets = [2, 0], sizes = [1, 384], strides = [1, 1]} : vector<8x384xf32> to vector<1x384xf32>
    %c20 = arith.constant 20 : index
    %195 = memref.load %arg1[%c20] : memref<72xf32, #tpu.memory_space<smem>>
    %196 = vector.broadcast %195 : f32 to vector<1x384xf32>
    %197 = arith.mulf %196, %194 : vector<1x384xf32>
    %198 = arith.addf %189, %197 : vector<1x384xf32>
    %c56 = arith.constant 56 : index
    %199 = memref.load %arg1[%c56] : memref<72xf32, #tpu.memory_space<smem>>
    %200 = vector.broadcast %199 : f32 to vector<1x384xf32>
    %201 = arith.mulf %200, %194 : vector<1x384xf32>
    %202 = arith.addf %193, %201 : vector<1x384xf32>
    %203 = vector.extract_strided_slice %4 {offsets = [2, 0], sizes = [1, 384], strides = [1, 1]} : vector<8x384xf32> to vector<1x384xf32>
    %c21 = arith.constant 21 : index
    %204 = memref.load %arg1[%c21] : memref<72xf32, #tpu.memory_space<smem>>
    %205 = vector.broadcast %204 : f32 to vector<1x384xf32>
    %206 = arith.mulf %205, %203 : vector<1x384xf32>
    %207 = arith.addf %198, %206 : vector<1x384xf32>
    %c57 = arith.constant 57 : index
    %208 = memref.load %arg1[%c57] : memref<72xf32, #tpu.memory_space<smem>>
    %209 = vector.broadcast %208 : f32 to vector<1x384xf32>
    %210 = arith.mulf %209, %203 : vector<1x384xf32>
    %211 = arith.addf %202, %210 : vector<1x384xf32>
    %212 = vector.extract_strided_slice %5 {offsets = [2, 0], sizes = [1, 384], strides = [1, 1]} : vector<8x384xf32> to vector<1x384xf32>
    %c22 = arith.constant 22 : index
    %213 = memref.load %arg1[%c22] : memref<72xf32, #tpu.memory_space<smem>>
    %214 = vector.broadcast %213 : f32 to vector<1x384xf32>
    %215 = arith.mulf %214, %212 : vector<1x384xf32>
    %216 = arith.addf %207, %215 : vector<1x384xf32>
    %c58 = arith.constant 58 : index
    %217 = memref.load %arg1[%c58] : memref<72xf32, #tpu.memory_space<smem>>
    %218 = vector.broadcast %217 : f32 to vector<1x384xf32>
    %219 = arith.mulf %218, %212 : vector<1x384xf32>
    %220 = arith.addf %211, %219 : vector<1x384xf32>
    %221 = vector.extract_strided_slice %6 {offsets = [2, 0], sizes = [1, 384], strides = [1, 1]} : vector<8x384xf32> to vector<1x384xf32>
    %c23 = arith.constant 23 : index
    %222 = memref.load %arg1[%c23] : memref<72xf32, #tpu.memory_space<smem>>
    %223 = vector.broadcast %222 : f32 to vector<1x384xf32>
    %224 = arith.mulf %223, %221 : vector<1x384xf32>
    %225 = arith.addf %216, %224 : vector<1x384xf32>
    %c59 = arith.constant 59 : index
    %226 = memref.load %arg1[%c59] : memref<72xf32, #tpu.memory_space<smem>>
    %227 = vector.broadcast %226 : f32 to vector<1x384xf32>
    %228 = arith.mulf %227, %221 : vector<1x384xf32>
    %229 = arith.addf %220, %228 : vector<1x384xf32>
    %230 = vector.extract_strided_slice %7 {offsets = [2, 0], sizes = [1, 384], strides = [1, 1]} : vector<8x384xf32> to vector<1x384xf32>
    %c24 = arith.constant 24 : index
    %231 = memref.load %arg1[%c24] : memref<72xf32, #tpu.memory_space<smem>>
    %232 = vector.broadcast %231 : f32 to vector<1x384xf32>
    %233 = arith.mulf %232, %230 : vector<1x384xf32>
    %234 = arith.addf %225, %233 : vector<1x384xf32>
    %c60 = arith.constant 60 : index
    %235 = memref.load %arg1[%c60] : memref<72xf32, #tpu.memory_space<smem>>
    %236 = vector.broadcast %235 : f32 to vector<1x384xf32>
    %237 = arith.mulf %236, %230 : vector<1x384xf32>
    %238 = arith.addf %229, %237 : vector<1x384xf32>
    %239 = vector.extract_strided_slice %8 {offsets = [2, 0], sizes = [1, 384], strides = [1, 1]} : vector<8x384xf32> to vector<1x384xf32>
    %c25 = arith.constant 25 : index
    %240 = memref.load %arg1[%c25] : memref<72xf32, #tpu.memory_space<smem>>
    %241 = vector.broadcast %240 : f32 to vector<1x384xf32>
    %242 = arith.mulf %241, %239 : vector<1x384xf32>
    %243 = arith.addf %234, %242 : vector<1x384xf32>
    %c61 = arith.constant 61 : index
    %244 = memref.load %arg1[%c61] : memref<72xf32, #tpu.memory_space<smem>>
    %245 = vector.broadcast %244 : f32 to vector<1x384xf32>
    %246 = arith.mulf %245, %239 : vector<1x384xf32>
    %247 = arith.addf %238, %246 : vector<1x384xf32>
    %248 = vector.extract_strided_slice %9 {offsets = [2, 0], sizes = [1, 384], strides = [1, 1]} : vector<8x384xf32> to vector<1x384xf32>
    %c26 = arith.constant 26 : index
    %249 = memref.load %arg1[%c26] : memref<72xf32, #tpu.memory_space<smem>>
    %250 = vector.broadcast %249 : f32 to vector<1x384xf32>
    %251 = arith.mulf %250, %248 : vector<1x384xf32>
    %252 = arith.addf %243, %251 : vector<1x384xf32>
    %c62 = arith.constant 62 : index
    %253 = memref.load %arg1[%c62] : memref<72xf32, #tpu.memory_space<smem>>
    %254 = vector.broadcast %253 : f32 to vector<1x384xf32>
    %255 = arith.mulf %254, %248 : vector<1x384xf32>
    %256 = arith.addf %247, %255 : vector<1x384xf32>
    %257 = vector.extract_strided_slice %1 {offsets = [3, 0], sizes = [1, 384], strides = [1, 1]} : vector<8x384xf32> to vector<1x384xf32>
    %c27 = arith.constant 27 : index
    %258 = memref.load %arg1[%c27] : memref<72xf32, #tpu.memory_space<smem>>
    %259 = vector.broadcast %258 : f32 to vector<1x384xf32>
    %260 = arith.mulf %259, %257 : vector<1x384xf32>
    %261 = arith.addf %252, %260 : vector<1x384xf32>
    %c63 = arith.constant 63 : index
    %262 = memref.load %arg1[%c63] : memref<72xf32, #tpu.memory_space<smem>>
    %263 = vector.broadcast %262 : f32 to vector<1x384xf32>
    %264 = arith.mulf %263, %257 : vector<1x384xf32>
    %265 = arith.addf %256, %264 : vector<1x384xf32>
    %266 = vector.extract_strided_slice %2 {offsets = [3, 0], sizes = [1, 384], strides = [1, 1]} : vector<8x384xf32> to vector<1x384xf32>
    %c28 = arith.constant 28 : index
    %267 = memref.load %arg1[%c28] : memref<72xf32, #tpu.memory_space<smem>>
    %268 = vector.broadcast %267 : f32 to vector<1x384xf32>
    %269 = arith.mulf %268, %266 : vector<1x384xf32>
    %270 = arith.addf %261, %269 : vector<1x384xf32>
    %c64 = arith.constant 64 : index
    %271 = memref.load %arg1[%c64] : memref<72xf32, #tpu.memory_space<smem>>
    %272 = vector.broadcast %271 : f32 to vector<1x384xf32>
    %273 = arith.mulf %272, %266 : vector<1x384xf32>
    %274 = arith.addf %265, %273 : vector<1x384xf32>
    %275 = vector.extract_strided_slice %3 {offsets = [3, 0], sizes = [1, 384], strides = [1, 1]} : vector<8x384xf32> to vector<1x384xf32>
    %c29 = arith.constant 29 : index
    %276 = memref.load %arg1[%c29] : memref<72xf32, #tpu.memory_space<smem>>
    %277 = vector.broadcast %276 : f32 to vector<1x384xf32>
    %278 = arith.mulf %277, %275 : vector<1x384xf32>
    %279 = arith.addf %270, %278 : vector<1x384xf32>
    %c65 = arith.constant 65 : index
    %280 = memref.load %arg1[%c65] : memref<72xf32, #tpu.memory_space<smem>>
    %281 = vector.broadcast %280 : f32 to vector<1x384xf32>
    %282 = arith.mulf %281, %275 : vector<1x384xf32>
    %283 = arith.addf %274, %282 : vector<1x384xf32>
    %284 = vector.extract_strided_slice %4 {offsets = [3, 0], sizes = [1, 384], strides = [1, 1]} : vector<8x384xf32> to vector<1x384xf32>
    %c30 = arith.constant 30 : index
    %285 = memref.load %arg1[%c30] : memref<72xf32, #tpu.memory_space<smem>>
    %286 = vector.broadcast %285 : f32 to vector<1x384xf32>
    %287 = arith.mulf %286, %284 : vector<1x384xf32>
    %288 = arith.addf %279, %287 : vector<1x384xf32>
    %c66 = arith.constant 66 : index
    %289 = memref.load %arg1[%c66] : memref<72xf32, #tpu.memory_space<smem>>
    %290 = vector.broadcast %289 : f32 to vector<1x384xf32>
    %291 = arith.mulf %290, %284 : vector<1x384xf32>
    %292 = arith.addf %283, %291 : vector<1x384xf32>
    %293 = vector.extract_strided_slice %5 {offsets = [3, 0], sizes = [1, 384], strides = [1, 1]} : vector<8x384xf32> to vector<1x384xf32>
    %c31 = arith.constant 31 : index
    %294 = memref.load %arg1[%c31] : memref<72xf32, #tpu.memory_space<smem>>
    %295 = vector.broadcast %294 : f32 to vector<1x384xf32>
    %296 = arith.mulf %295, %293 : vector<1x384xf32>
    %297 = arith.addf %288, %296 : vector<1x384xf32>
    %c67 = arith.constant 67 : index
    %298 = memref.load %arg1[%c67] : memref<72xf32, #tpu.memory_space<smem>>
    %299 = vector.broadcast %298 : f32 to vector<1x384xf32>
    %300 = arith.mulf %299, %293 : vector<1x384xf32>
    %301 = arith.addf %292, %300 : vector<1x384xf32>
    %302 = vector.extract_strided_slice %6 {offsets = [3, 0], sizes = [1, 384], strides = [1, 1]} : vector<8x384xf32> to vector<1x384xf32>
    %c32 = arith.constant 32 : index
    %303 = memref.load %arg1[%c32] : memref<72xf32, #tpu.memory_space<smem>>
    %304 = vector.broadcast %303 : f32 to vector<1x384xf32>
    %305 = arith.mulf %304, %302 : vector<1x384xf32>
    %306 = arith.addf %297, %305 : vector<1x384xf32>
    %c68 = arith.constant 68 : index
    %307 = memref.load %arg1[%c68] : memref<72xf32, #tpu.memory_space<smem>>
    %308 = vector.broadcast %307 : f32 to vector<1x384xf32>
    %309 = arith.mulf %308, %302 : vector<1x384xf32>
    %310 = arith.addf %301, %309 : vector<1x384xf32>
    %311 = vector.extract_strided_slice %7 {offsets = [3, 0], sizes = [1, 384], strides = [1, 1]} : vector<8x384xf32> to vector<1x384xf32>
    %c33 = arith.constant 33 : index
    %312 = memref.load %arg1[%c33] : memref<72xf32, #tpu.memory_space<smem>>
    %313 = vector.broadcast %312 : f32 to vector<1x384xf32>
    %314 = arith.mulf %313, %311 : vector<1x384xf32>
    %315 = arith.addf %306, %314 : vector<1x384xf32>
    %c69 = arith.constant 69 : index
    %316 = memref.load %arg1[%c69] : memref<72xf32, #tpu.memory_space<smem>>
    %317 = vector.broadcast %316 : f32 to vector<1x384xf32>
    %318 = arith.mulf %317, %311 : vector<1x384xf32>
    %319 = arith.addf %310, %318 : vector<1x384xf32>
    %320 = vector.extract_strided_slice %8 {offsets = [3, 0], sizes = [1, 384], strides = [1, 1]} : vector<8x384xf32> to vector<1x384xf32>
    %c34 = arith.constant 34 : index
    %321 = memref.load %arg1[%c34] : memref<72xf32, #tpu.memory_space<smem>>
    %322 = vector.broadcast %321 : f32 to vector<1x384xf32>
    %323 = arith.mulf %322, %320 : vector<1x384xf32>
    %324 = arith.addf %315, %323 : vector<1x384xf32>
    %c70 = arith.constant 70 : index
    %325 = memref.load %arg1[%c70] : memref<72xf32, #tpu.memory_space<smem>>
    %326 = vector.broadcast %325 : f32 to vector<1x384xf32>
    %327 = arith.mulf %326, %320 : vector<1x384xf32>
    %328 = arith.addf %319, %327 : vector<1x384xf32>
    %329 = vector.extract_strided_slice %9 {offsets = [3, 0], sizes = [1, 384], strides = [1, 1]} : vector<8x384xf32> to vector<1x384xf32>
    %c35 = arith.constant 35 : index
    %330 = memref.load %arg1[%c35] : memref<72xf32, #tpu.memory_space<smem>>
    %331 = vector.broadcast %330 : f32 to vector<1x384xf32>
    %332 = arith.mulf %331, %329 : vector<1x384xf32>
    %333 = arith.addf %324, %332 : vector<1x384xf32>
    %c71 = arith.constant 71 : index
    %334 = memref.load %arg1[%c71] : memref<72xf32, #tpu.memory_space<smem>>
    %335 = vector.broadcast %334 : f32 to vector<1x384xf32>
    %336 = arith.mulf %335, %329 : vector<1x384xf32>
    %337 = arith.addf %328, %336 : vector<1x384xf32>
    %c0_4 = arith.constant 0 : index
    %338 = memref.load %arg2[%c0_4] : memref<2xf32, #tpu.memory_space<smem>>
    %339 = vector.broadcast %338 : f32 to vector<1x384xf32>
    %c1_5 = arith.constant 1 : index
    %340 = memref.load %arg2[%c1_5] : memref<2xf32, #tpu.memory_space<smem>>
    %341 = vector.broadcast %340 : f32 to vector<1x384xf32>
    %342 = vector.extract_strided_slice %1 {offsets = [4, 0], sizes = [1, 384], strides = [1, 1]} : vector<8x384xf32> to vector<1x384xf32>
    %c0_6 = arith.constant 0 : index
    %343 = memref.load %arg1[%c0_6] : memref<72xf32, #tpu.memory_space<smem>>
    %344 = vector.broadcast %343 : f32 to vector<1x384xf32>
    %345 = arith.mulf %344, %342 : vector<1x384xf32>
    %346 = arith.addf %339, %345 : vector<1x384xf32>
    %c36_7 = arith.constant 36 : index
    %347 = memref.load %arg1[%c36_7] : memref<72xf32, #tpu.memory_space<smem>>
    %348 = vector.broadcast %347 : f32 to vector<1x384xf32>
    %349 = arith.mulf %348, %342 : vector<1x384xf32>
    %350 = arith.addf %341, %349 : vector<1x384xf32>
    %351 = vector.extract_strided_slice %2 {offsets = [4, 0], sizes = [1, 384], strides = [1, 1]} : vector<8x384xf32> to vector<1x384xf32>
    %c1_8 = arith.constant 1 : index
    %352 = memref.load %arg1[%c1_8] : memref<72xf32, #tpu.memory_space<smem>>
    %353 = vector.broadcast %352 : f32 to vector<1x384xf32>
    %354 = arith.mulf %353, %351 : vector<1x384xf32>
    %355 = arith.addf %346, %354 : vector<1x384xf32>
    %c37_9 = arith.constant 37 : index
    %356 = memref.load %arg1[%c37_9] : memref<72xf32, #tpu.memory_space<smem>>
    %357 = vector.broadcast %356 : f32 to vector<1x384xf32>
    %358 = arith.mulf %357, %351 : vector<1x384xf32>
    %359 = arith.addf %350, %358 : vector<1x384xf32>
    %360 = vector.extract_strided_slice %3 {offsets = [4, 0], sizes = [1, 384], strides = [1, 1]} : vector<8x384xf32> to vector<1x384xf32>
    %c2_10 = arith.constant 2 : index
    %361 = memref.load %arg1[%c2_10] : memref<72xf32, #tpu.memory_space<smem>>
    %362 = vector.broadcast %361 : f32 to vector<1x384xf32>
    %363 = arith.mulf %362, %360 : vector<1x384xf32>
    %364 = arith.addf %355, %363 : vector<1x384xf32>
    %c38_11 = arith.constant 38 : index
    %365 = memref.load %arg1[%c38_11] : memref<72xf32, #tpu.memory_space<smem>>
    %366 = vector.broadcast %365 : f32 to vector<1x384xf32>
    %367 = arith.mulf %366, %360 : vector<1x384xf32>
    %368 = arith.addf %359, %367 : vector<1x384xf32>
    %369 = vector.extract_strided_slice %4 {offsets = [4, 0], sizes = [1, 384], strides = [1, 1]} : vector<8x384xf32> to vector<1x384xf32>
    %c3_12 = arith.constant 3 : index
    %370 = memref.load %arg1[%c3_12] : memref<72xf32, #tpu.memory_space<smem>>
    %371 = vector.broadcast %370 : f32 to vector<1x384xf32>
    %372 = arith.mulf %371, %369 : vector<1x384xf32>
    %373 = arith.addf %364, %372 : vector<1x384xf32>
    %c39_13 = arith.constant 39 : index
    %374 = memref.load %arg1[%c39_13] : memref<72xf32, #tpu.memory_space<smem>>
    %375 = vector.broadcast %374 : f32 to vector<1x384xf32>
    %376 = arith.mulf %375, %369 : vector<1x384xf32>
    %377 = arith.addf %368, %376 : vector<1x384xf32>
    %378 = vector.extract_strided_slice %5 {offsets = [4, 0], sizes = [1, 384], strides = [1, 1]} : vector<8x384xf32> to vector<1x384xf32>
    %c4_14 = arith.constant 4 : index
    %379 = memref.load %arg1[%c4_14] : memref<72xf32, #tpu.memory_space<smem>>
    %380 = vector.broadcast %379 : f32 to vector<1x384xf32>
    %381 = arith.mulf %380, %378 : vector<1x384xf32>
    %382 = arith.addf %373, %381 : vector<1x384xf32>
    %c40_15 = arith.constant 40 : index
    %383 = memref.load %arg1[%c40_15] : memref<72xf32, #tpu.memory_space<smem>>
    %384 = vector.broadcast %383 : f32 to vector<1x384xf32>
    %385 = arith.mulf %384, %378 : vector<1x384xf32>
    %386 = arith.addf %377, %385 : vector<1x384xf32>
    %387 = vector.extract_strided_slice %6 {offsets = [4, 0], sizes = [1, 384], strides = [1, 1]} : vector<8x384xf32> to vector<1x384xf32>
    %c5_16 = arith.constant 5 : index
    %388 = memref.load %arg1[%c5_16] : memref<72xf32, #tpu.memory_space<smem>>
    %389 = vector.broadcast %388 : f32 to vector<1x384xf32>
    %390 = arith.mulf %389, %387 : vector<1x384xf32>
    %391 = arith.addf %382, %390 : vector<1x384xf32>
    %c41_17 = arith.constant 41 : index
    %392 = memref.load %arg1[%c41_17] : memref<72xf32, #tpu.memory_space<smem>>
    %393 = vector.broadcast %392 : f32 to vector<1x384xf32>
    %394 = arith.mulf %393, %387 : vector<1x384xf32>
    %395 = arith.addf %386, %394 : vector<1x384xf32>
    %396 = vector.extract_strided_slice %7 {offsets = [4, 0], sizes = [1, 384], strides = [1, 1]} : vector<8x384xf32> to vector<1x384xf32>
    %c6_18 = arith.constant 6 : index
    %397 = memref.load %arg1[%c6_18] : memref<72xf32, #tpu.memory_space<smem>>
    %398 = vector.broadcast %397 : f32 to vector<1x384xf32>
    %399 = arith.mulf %398, %396 : vector<1x384xf32>
    %400 = arith.addf %391, %399 : vector<1x384xf32>
    %c42_19 = arith.constant 42 : index
    %401 = memref.load %arg1[%c42_19] : memref<72xf32, #tpu.memory_space<smem>>
    %402 = vector.broadcast %401 : f32 to vector<1x384xf32>
    %403 = arith.mulf %402, %396 : vector<1x384xf32>
    %404 = arith.addf %395, %403 : vector<1x384xf32>
    %405 = vector.extract_strided_slice %8 {offsets = [4, 0], sizes = [1, 384], strides = [1, 1]} : vector<8x384xf32> to vector<1x384xf32>
    %c7_20 = arith.constant 7 : index
    %406 = memref.load %arg1[%c7_20] : memref<72xf32, #tpu.memory_space<smem>>
    %407 = vector.broadcast %406 : f32 to vector<1x384xf32>
    %408 = arith.mulf %407, %405 : vector<1x384xf32>
    %409 = arith.addf %400, %408 : vector<1x384xf32>
    %c43_21 = arith.constant 43 : index
    %410 = memref.load %arg1[%c43_21] : memref<72xf32, #tpu.memory_space<smem>>
    %411 = vector.broadcast %410 : f32 to vector<1x384xf32>
    %412 = arith.mulf %411, %405 : vector<1x384xf32>
    %413 = arith.addf %404, %412 : vector<1x384xf32>
    %414 = vector.extract_strided_slice %9 {offsets = [4, 0], sizes = [1, 384], strides = [1, 1]} : vector<8x384xf32> to vector<1x384xf32>
    %c8_22 = arith.constant 8 : index
    %415 = memref.load %arg1[%c8_22] : memref<72xf32, #tpu.memory_space<smem>>
    %416 = vector.broadcast %415 : f32 to vector<1x384xf32>
    %417 = arith.mulf %416, %414 : vector<1x384xf32>
    %418 = arith.addf %409, %417 : vector<1x384xf32>
    %c44_23 = arith.constant 44 : index
    %419 = memref.load %arg1[%c44_23] : memref<72xf32, #tpu.memory_space<smem>>
    %420 = vector.broadcast %419 : f32 to vector<1x384xf32>
    %421 = arith.mulf %420, %414 : vector<1x384xf32>
    %422 = arith.addf %413, %421 : vector<1x384xf32>
    %423 = vector.extract_strided_slice %1 {offsets = [5, 0], sizes = [1, 384], strides = [1, 1]} : vector<8x384xf32> to vector<1x384xf32>
    %c9_24 = arith.constant 9 : index
    %424 = memref.load %arg1[%c9_24] : memref<72xf32, #tpu.memory_space<smem>>
    %425 = vector.broadcast %424 : f32 to vector<1x384xf32>
    %426 = arith.mulf %425, %423 : vector<1x384xf32>
    %427 = arith.addf %418, %426 : vector<1x384xf32>
    %c45_25 = arith.constant 45 : index
    %428 = memref.load %arg1[%c45_25] : memref<72xf32, #tpu.memory_space<smem>>
    %429 = vector.broadcast %428 : f32 to vector<1x384xf32>
    %430 = arith.mulf %429, %423 : vector<1x384xf32>
    %431 = arith.addf %422, %430 : vector<1x384xf32>
    %432 = vector.extract_strided_slice %2 {offsets = [5, 0], sizes = [1, 384], strides = [1, 1]} : vector<8x384xf32> to vector<1x384xf32>
    %c10_26 = arith.constant 10 : index
    %433 = memref.load %arg1[%c10_26] : memref<72xf32, #tpu.memory_space<smem>>
    %434 = vector.broadcast %433 : f32 to vector<1x384xf32>
    %435 = arith.mulf %434, %432 : vector<1x384xf32>
    %436 = arith.addf %427, %435 : vector<1x384xf32>
    %c46_27 = arith.constant 46 : index
    %437 = memref.load %arg1[%c46_27] : memref<72xf32, #tpu.memory_space<smem>>
    %438 = vector.broadcast %437 : f32 to vector<1x384xf32>
    %439 = arith.mulf %438, %432 : vector<1x384xf32>
    %440 = arith.addf %431, %439 : vector<1x384xf32>
    %441 = vector.extract_strided_slice %3 {offsets = [5, 0], sizes = [1, 384], strides = [1, 1]} : vector<8x384xf32> to vector<1x384xf32>
    %c11_28 = arith.constant 11 : index
    %442 = memref.load %arg1[%c11_28] : memref<72xf32, #tpu.memory_space<smem>>
    %443 = vector.broadcast %442 : f32 to vector<1x384xf32>
    %444 = arith.mulf %443, %441 : vector<1x384xf32>
    %445 = arith.addf %436, %444 : vector<1x384xf32>
    %c47_29 = arith.constant 47 : index
    %446 = memref.load %arg1[%c47_29] : memref<72xf32, #tpu.memory_space<smem>>
    %447 = vector.broadcast %446 : f32 to vector<1x384xf32>
    %448 = arith.mulf %447, %441 : vector<1x384xf32>
    %449 = arith.addf %440, %448 : vector<1x384xf32>
    %450 = vector.extract_strided_slice %4 {offsets = [5, 0], sizes = [1, 384], strides = [1, 1]} : vector<8x384xf32> to vector<1x384xf32>
    %c12_30 = arith.constant 12 : index
    %451 = memref.load %arg1[%c12_30] : memref<72xf32, #tpu.memory_space<smem>>
    %452 = vector.broadcast %451 : f32 to vector<1x384xf32>
    %453 = arith.mulf %452, %450 : vector<1x384xf32>
    %454 = arith.addf %445, %453 : vector<1x384xf32>
    %c48_31 = arith.constant 48 : index
    %455 = memref.load %arg1[%c48_31] : memref<72xf32, #tpu.memory_space<smem>>
    %456 = vector.broadcast %455 : f32 to vector<1x384xf32>
    %457 = arith.mulf %456, %450 : vector<1x384xf32>
    %458 = arith.addf %449, %457 : vector<1x384xf32>
    %459 = vector.extract_strided_slice %5 {offsets = [5, 0], sizes = [1, 384], strides = [1, 1]} : vector<8x384xf32> to vector<1x384xf32>
    %c13_32 = arith.constant 13 : index
    %460 = memref.load %arg1[%c13_32] : memref<72xf32, #tpu.memory_space<smem>>
    %461 = vector.broadcast %460 : f32 to vector<1x384xf32>
    %462 = arith.mulf %461, %459 : vector<1x384xf32>
    %463 = arith.addf %454, %462 : vector<1x384xf32>
    %c49_33 = arith.constant 49 : index
    %464 = memref.load %arg1[%c49_33] : memref<72xf32, #tpu.memory_space<smem>>
    %465 = vector.broadcast %464 : f32 to vector<1x384xf32>
    %466 = arith.mulf %465, %459 : vector<1x384xf32>
    %467 = arith.addf %458, %466 : vector<1x384xf32>
    %468 = vector.extract_strided_slice %6 {offsets = [5, 0], sizes = [1, 384], strides = [1, 1]} : vector<8x384xf32> to vector<1x384xf32>
    %c14_34 = arith.constant 14 : index
    %469 = memref.load %arg1[%c14_34] : memref<72xf32, #tpu.memory_space<smem>>
    %470 = vector.broadcast %469 : f32 to vector<1x384xf32>
    %471 = arith.mulf %470, %468 : vector<1x384xf32>
    %472 = arith.addf %463, %471 : vector<1x384xf32>
    %c50_35 = arith.constant 50 : index
    %473 = memref.load %arg1[%c50_35] : memref<72xf32, #tpu.memory_space<smem>>
    %474 = vector.broadcast %473 : f32 to vector<1x384xf32>
    %475 = arith.mulf %474, %468 : vector<1x384xf32>
    %476 = arith.addf %467, %475 : vector<1x384xf32>
    %477 = vector.extract_strided_slice %7 {offsets = [5, 0], sizes = [1, 384], strides = [1, 1]} : vector<8x384xf32> to vector<1x384xf32>
    %c15_36 = arith.constant 15 : index
    %478 = memref.load %arg1[%c15_36] : memref<72xf32, #tpu.memory_space<smem>>
    %479 = vector.broadcast %478 : f32 to vector<1x384xf32>
    %480 = arith.mulf %479, %477 : vector<1x384xf32>
    %481 = arith.addf %472, %480 : vector<1x384xf32>
    %c51_37 = arith.constant 51 : index
    %482 = memref.load %arg1[%c51_37] : memref<72xf32, #tpu.memory_space<smem>>
    %483 = vector.broadcast %482 : f32 to vector<1x384xf32>
    %484 = arith.mulf %483, %477 : vector<1x384xf32>
    %485 = arith.addf %476, %484 : vector<1x384xf32>
    %486 = vector.extract_strided_slice %8 {offsets = [5, 0], sizes = [1, 384], strides = [1, 1]} : vector<8x384xf32> to vector<1x384xf32>
    %c16_38 = arith.constant 16 : index
    %487 = memref.load %arg1[%c16_38] : memref<72xf32, #tpu.memory_space<smem>>
    %488 = vector.broadcast %487 : f32 to vector<1x384xf32>
    %489 = arith.mulf %488, %486 : vector<1x384xf32>
    %490 = arith.addf %481, %489 : vector<1x384xf32>
    %c52_39 = arith.constant 52 : index
    %491 = memref.load %arg1[%c52_39] : memref<72xf32, #tpu.memory_space<smem>>
    %492 = vector.broadcast %491 : f32 to vector<1x384xf32>
    %493 = arith.mulf %492, %486 : vector<1x384xf32>
    %494 = arith.addf %485, %493 : vector<1x384xf32>
    %495 = vector.extract_strided_slice %9 {offsets = [5, 0], sizes = [1, 384], strides = [1, 1]} : vector<8x384xf32> to vector<1x384xf32>
    %c17_40 = arith.constant 17 : index
    %496 = memref.load %arg1[%c17_40] : memref<72xf32, #tpu.memory_space<smem>>
    %497 = vector.broadcast %496 : f32 to vector<1x384xf32>
    %498 = arith.mulf %497, %495 : vector<1x384xf32>
    %499 = arith.addf %490, %498 : vector<1x384xf32>
    %c53_41 = arith.constant 53 : index
    %500 = memref.load %arg1[%c53_41] : memref<72xf32, #tpu.memory_space<smem>>
    %501 = vector.broadcast %500 : f32 to vector<1x384xf32>
    %502 = arith.mulf %501, %495 : vector<1x384xf32>
    %503 = arith.addf %494, %502 : vector<1x384xf32>
    %504 = vector.extract_strided_slice %1 {offsets = [6, 0], sizes = [1, 384], strides = [1, 1]} : vector<8x384xf32> to vector<1x384xf32>
    %c18_42 = arith.constant 18 : index
    %505 = memref.load %arg1[%c18_42] : memref<72xf32, #tpu.memory_space<smem>>
    %506 = vector.broadcast %505 : f32 to vector<1x384xf32>
    %507 = arith.mulf %506, %504 : vector<1x384xf32>
    %508 = arith.addf %499, %507 : vector<1x384xf32>
    %c54_43 = arith.constant 54 : index
    %509 = memref.load %arg1[%c54_43] : memref<72xf32, #tpu.memory_space<smem>>
    %510 = vector.broadcast %509 : f32 to vector<1x384xf32>
    %511 = arith.mulf %510, %504 : vector<1x384xf32>
    %512 = arith.addf %503, %511 : vector<1x384xf32>
    %513 = vector.extract_strided_slice %2 {offsets = [6, 0], sizes = [1, 384], strides = [1, 1]} : vector<8x384xf32> to vector<1x384xf32>
    %c19_44 = arith.constant 19 : index
    %514 = memref.load %arg1[%c19_44] : memref<72xf32, #tpu.memory_space<smem>>
    %515 = vector.broadcast %514 : f32 to vector<1x384xf32>
    %516 = arith.mulf %515, %513 : vector<1x384xf32>
    %517 = arith.addf %508, %516 : vector<1x384xf32>
    %c55_45 = arith.constant 55 : index
    %518 = memref.load %arg1[%c55_45] : memref<72xf32, #tpu.memory_space<smem>>
    %519 = vector.broadcast %518 : f32 to vector<1x384xf32>
    %520 = arith.mulf %519, %513 : vector<1x384xf32>
    %521 = arith.addf %512, %520 : vector<1x384xf32>
    %522 = vector.extract_strided_slice %3 {offsets = [6, 0], sizes = [1, 384], strides = [1, 1]} : vector<8x384xf32> to vector<1x384xf32>
    %c20_46 = arith.constant 20 : index
    %523 = memref.load %arg1[%c20_46] : memref<72xf32, #tpu.memory_space<smem>>
    %524 = vector.broadcast %523 : f32 to vector<1x384xf32>
    %525 = arith.mulf %524, %522 : vector<1x384xf32>
    %526 = arith.addf %517, %525 : vector<1x384xf32>
    %c56_47 = arith.constant 56 : index
    %527 = memref.load %arg1[%c56_47] : memref<72xf32, #tpu.memory_space<smem>>
    %528 = vector.broadcast %527 : f32 to vector<1x384xf32>
    %529 = arith.mulf %528, %522 : vector<1x384xf32>
    %530 = arith.addf %521, %529 : vector<1x384xf32>
    %531 = vector.extract_strided_slice %4 {offsets = [6, 0], sizes = [1, 384], strides = [1, 1]} : vector<8x384xf32> to vector<1x384xf32>
    %c21_48 = arith.constant 21 : index
    %532 = memref.load %arg1[%c21_48] : memref<72xf32, #tpu.memory_space<smem>>
    %533 = vector.broadcast %532 : f32 to vector<1x384xf32>
    %534 = arith.mulf %533, %531 : vector<1x384xf32>
    %535 = arith.addf %526, %534 : vector<1x384xf32>
    %c57_49 = arith.constant 57 : index
    %536 = memref.load %arg1[%c57_49] : memref<72xf32, #tpu.memory_space<smem>>
    %537 = vector.broadcast %536 : f32 to vector<1x384xf32>
    %538 = arith.mulf %537, %531 : vector<1x384xf32>
    %539 = arith.addf %530, %538 : vector<1x384xf32>
    %540 = vector.extract_strided_slice %5 {offsets = [6, 0], sizes = [1, 384], strides = [1, 1]} : vector<8x384xf32> to vector<1x384xf32>
    %c22_50 = arith.constant 22 : index
    %541 = memref.load %arg1[%c22_50] : memref<72xf32, #tpu.memory_space<smem>>
    %542 = vector.broadcast %541 : f32 to vector<1x384xf32>
    %543 = arith.mulf %542, %540 : vector<1x384xf32>
    %544 = arith.addf %535, %543 : vector<1x384xf32>
    %c58_51 = arith.constant 58 : index
    %545 = memref.load %arg1[%c58_51] : memref<72xf32, #tpu.memory_space<smem>>
    %546 = vector.broadcast %545 : f32 to vector<1x384xf32>
    %547 = arith.mulf %546, %540 : vector<1x384xf32>
    %548 = arith.addf %539, %547 : vector<1x384xf32>
    %549 = vector.extract_strided_slice %6 {offsets = [6, 0], sizes = [1, 384], strides = [1, 1]} : vector<8x384xf32> to vector<1x384xf32>
    %c23_52 = arith.constant 23 : index
    %550 = memref.load %arg1[%c23_52] : memref<72xf32, #tpu.memory_space<smem>>
    %551 = vector.broadcast %550 : f32 to vector<1x384xf32>
    %552 = arith.mulf %551, %549 : vector<1x384xf32>
    %553 = arith.addf %544, %552 : vector<1x384xf32>
    %c59_53 = arith.constant 59 : index
    %554 = memref.load %arg1[%c59_53] : memref<72xf32, #tpu.memory_space<smem>>
    %555 = vector.broadcast %554 : f32 to vector<1x384xf32>
    %556 = arith.mulf %555, %549 : vector<1x384xf32>
    %557 = arith.addf %548, %556 : vector<1x384xf32>
    %558 = vector.extract_strided_slice %7 {offsets = [6, 0], sizes = [1, 384], strides = [1, 1]} : vector<8x384xf32> to vector<1x384xf32>
    %c24_54 = arith.constant 24 : index
    %559 = memref.load %arg1[%c24_54] : memref<72xf32, #tpu.memory_space<smem>>
    %560 = vector.broadcast %559 : f32 to vector<1x384xf32>
    %561 = arith.mulf %560, %558 : vector<1x384xf32>
    %562 = arith.addf %553, %561 : vector<1x384xf32>
    %c60_55 = arith.constant 60 : index
    %563 = memref.load %arg1[%c60_55] : memref<72xf32, #tpu.memory_space<smem>>
    %564 = vector.broadcast %563 : f32 to vector<1x384xf32>
    %565 = arith.mulf %564, %558 : vector<1x384xf32>
    %566 = arith.addf %557, %565 : vector<1x384xf32>
    %567 = vector.extract_strided_slice %8 {offsets = [6, 0], sizes = [1, 384], strides = [1, 1]} : vector<8x384xf32> to vector<1x384xf32>
    %c25_56 = arith.constant 25 : index
    %568 = memref.load %arg1[%c25_56] : memref<72xf32, #tpu.memory_space<smem>>
    %569 = vector.broadcast %568 : f32 to vector<1x384xf32>
    %570 = arith.mulf %569, %567 : vector<1x384xf32>
    %571 = arith.addf %562, %570 : vector<1x384xf32>
    %c61_57 = arith.constant 61 : index
    %572 = memref.load %arg1[%c61_57] : memref<72xf32, #tpu.memory_space<smem>>
    %573 = vector.broadcast %572 : f32 to vector<1x384xf32>
    %574 = arith.mulf %573, %567 : vector<1x384xf32>
    %575 = arith.addf %566, %574 : vector<1x384xf32>
    %576 = vector.extract_strided_slice %9 {offsets = [6, 0], sizes = [1, 384], strides = [1, 1]} : vector<8x384xf32> to vector<1x384xf32>
    %c26_58 = arith.constant 26 : index
    %577 = memref.load %arg1[%c26_58] : memref<72xf32, #tpu.memory_space<smem>>
    %578 = vector.broadcast %577 : f32 to vector<1x384xf32>
    %579 = arith.mulf %578, %576 : vector<1x384xf32>
    %580 = arith.addf %571, %579 : vector<1x384xf32>
    %c62_59 = arith.constant 62 : index
    %581 = memref.load %arg1[%c62_59] : memref<72xf32, #tpu.memory_space<smem>>
    %582 = vector.broadcast %581 : f32 to vector<1x384xf32>
    %583 = arith.mulf %582, %576 : vector<1x384xf32>
    %584 = arith.addf %575, %583 : vector<1x384xf32>
    %585 = vector.extract_strided_slice %1 {offsets = [7, 0], sizes = [1, 384], strides = [1, 1]} : vector<8x384xf32> to vector<1x384xf32>
    %c27_60 = arith.constant 27 : index
    %586 = memref.load %arg1[%c27_60] : memref<72xf32, #tpu.memory_space<smem>>
    %587 = vector.broadcast %586 : f32 to vector<1x384xf32>
    %588 = arith.mulf %587, %585 : vector<1x384xf32>
    %589 = arith.addf %580, %588 : vector<1x384xf32>
    %c63_61 = arith.constant 63 : index
    %590 = memref.load %arg1[%c63_61] : memref<72xf32, #tpu.memory_space<smem>>
    %591 = vector.broadcast %590 : f32 to vector<1x384xf32>
    %592 = arith.mulf %591, %585 : vector<1x384xf32>
    %593 = arith.addf %584, %592 : vector<1x384xf32>
    %594 = vector.extract_strided_slice %2 {offsets = [7, 0], sizes = [1, 384], strides = [1, 1]} : vector<8x384xf32> to vector<1x384xf32>
    %c28_62 = arith.constant 28 : index
    %595 = memref.load %arg1[%c28_62] : memref<72xf32, #tpu.memory_space<smem>>
    %596 = vector.broadcast %595 : f32 to vector<1x384xf32>
    %597 = arith.mulf %596, %594 : vector<1x384xf32>
    %598 = arith.addf %589, %597 : vector<1x384xf32>
    %c64_63 = arith.constant 64 : index
    %599 = memref.load %arg1[%c64_63] : memref<72xf32, #tpu.memory_space<smem>>
    %600 = vector.broadcast %599 : f32 to vector<1x384xf32>
    %601 = arith.mulf %600, %594 : vector<1x384xf32>
    %602 = arith.addf %593, %601 : vector<1x384xf32>
    %603 = vector.extract_strided_slice %3 {offsets = [7, 0], sizes = [1, 384], strides = [1, 1]} : vector<8x384xf32> to vector<1x384xf32>
    %c29_64 = arith.constant 29 : index
    %604 = memref.load %arg1[%c29_64] : memref<72xf32, #tpu.memory_space<smem>>
    %605 = vector.broadcast %604 : f32 to vector<1x384xf32>
    %606 = arith.mulf %605, %603 : vector<1x384xf32>
    %607 = arith.addf %598, %606 : vector<1x384xf32>
    %c65_65 = arith.constant 65 : index
    %608 = memref.load %arg1[%c65_65] : memref<72xf32, #tpu.memory_space<smem>>
    %609 = vector.broadcast %608 : f32 to vector<1x384xf32>
    %610 = arith.mulf %609, %603 : vector<1x384xf32>
    %611 = arith.addf %602, %610 : vector<1x384xf32>
    %612 = vector.extract_strided_slice %4 {offsets = [7, 0], sizes = [1, 384], strides = [1, 1]} : vector<8x384xf32> to vector<1x384xf32>
    %c30_66 = arith.constant 30 : index
    %613 = memref.load %arg1[%c30_66] : memref<72xf32, #tpu.memory_space<smem>>
    %614 = vector.broadcast %613 : f32 to vector<1x384xf32>
    %615 = arith.mulf %614, %612 : vector<1x384xf32>
    %616 = arith.addf %607, %615 : vector<1x384xf32>
    %c66_67 = arith.constant 66 : index
    %617 = memref.load %arg1[%c66_67] : memref<72xf32, #tpu.memory_space<smem>>
    %618 = vector.broadcast %617 : f32 to vector<1x384xf32>
    %619 = arith.mulf %618, %612 : vector<1x384xf32>
    %620 = arith.addf %611, %619 : vector<1x384xf32>
    %621 = vector.extract_strided_slice %5 {offsets = [7, 0], sizes = [1, 384], strides = [1, 1]} : vector<8x384xf32> to vector<1x384xf32>
    %c31_68 = arith.constant 31 : index
    %622 = memref.load %arg1[%c31_68] : memref<72xf32, #tpu.memory_space<smem>>
    %623 = vector.broadcast %622 : f32 to vector<1x384xf32>
    %624 = arith.mulf %623, %621 : vector<1x384xf32>
    %625 = arith.addf %616, %624 : vector<1x384xf32>
    %c67_69 = arith.constant 67 : index
    %626 = memref.load %arg1[%c67_69] : memref<72xf32, #tpu.memory_space<smem>>
    %627 = vector.broadcast %626 : f32 to vector<1x384xf32>
    %628 = arith.mulf %627, %621 : vector<1x384xf32>
    %629 = arith.addf %620, %628 : vector<1x384xf32>
    %630 = vector.extract_strided_slice %6 {offsets = [7, 0], sizes = [1, 384], strides = [1, 1]} : vector<8x384xf32> to vector<1x384xf32>
    %c32_70 = arith.constant 32 : index
    %631 = memref.load %arg1[%c32_70] : memref<72xf32, #tpu.memory_space<smem>>
    %632 = vector.broadcast %631 : f32 to vector<1x384xf32>
    %633 = arith.mulf %632, %630 : vector<1x384xf32>
    %634 = arith.addf %625, %633 : vector<1x384xf32>
    %c68_71 = arith.constant 68 : index
    %635 = memref.load %arg1[%c68_71] : memref<72xf32, #tpu.memory_space<smem>>
    %636 = vector.broadcast %635 : f32 to vector<1x384xf32>
    %637 = arith.mulf %636, %630 : vector<1x384xf32>
    %638 = arith.addf %629, %637 : vector<1x384xf32>
    %639 = vector.extract_strided_slice %7 {offsets = [7, 0], sizes = [1, 384], strides = [1, 1]} : vector<8x384xf32> to vector<1x384xf32>
    %c33_72 = arith.constant 33 : index
    %640 = memref.load %arg1[%c33_72] : memref<72xf32, #tpu.memory_space<smem>>
    %641 = vector.broadcast %640 : f32 to vector<1x384xf32>
    %642 = arith.mulf %641, %639 : vector<1x384xf32>
    %643 = arith.addf %634, %642 : vector<1x384xf32>
    %c69_73 = arith.constant 69 : index
    %644 = memref.load %arg1[%c69_73] : memref<72xf32, #tpu.memory_space<smem>>
    %645 = vector.broadcast %644 : f32 to vector<1x384xf32>
    %646 = arith.mulf %645, %639 : vector<1x384xf32>
    %647 = arith.addf %638, %646 : vector<1x384xf32>
    %648 = vector.extract_strided_slice %8 {offsets = [7, 0], sizes = [1, 384], strides = [1, 1]} : vector<8x384xf32> to vector<1x384xf32>
    %c34_74 = arith.constant 34 : index
    %649 = memref.load %arg1[%c34_74] : memref<72xf32, #tpu.memory_space<smem>>
    %650 = vector.broadcast %649 : f32 to vector<1x384xf32>
    %651 = arith.mulf %650, %648 : vector<1x384xf32>
    %652 = arith.addf %643, %651 : vector<1x384xf32>
    %c70_75 = arith.constant 70 : index
    %653 = memref.load %arg1[%c70_75] : memref<72xf32, #tpu.memory_space<smem>>
    %654 = vector.broadcast %653 : f32 to vector<1x384xf32>
    %655 = arith.mulf %654, %648 : vector<1x384xf32>
    %656 = arith.addf %647, %655 : vector<1x384xf32>
    %657 = vector.extract_strided_slice %9 {offsets = [7, 0], sizes = [1, 384], strides = [1, 1]} : vector<8x384xf32> to vector<1x384xf32>
    %c35_76 = arith.constant 35 : index
    %658 = memref.load %arg1[%c35_76] : memref<72xf32, #tpu.memory_space<smem>>
    %659 = vector.broadcast %658 : f32 to vector<1x384xf32>
    %660 = arith.mulf %659, %657 : vector<1x384xf32>
    %661 = arith.addf %652, %660 : vector<1x384xf32>
    %c71_77 = arith.constant 71 : index
    %662 = memref.load %arg1[%c71_77] : memref<72xf32, #tpu.memory_space<smem>>
    %663 = vector.broadcast %662 : f32 to vector<1x384xf32>
    %664 = arith.mulf %663, %657 : vector<1x384xf32>
    %665 = arith.addf %656, %664 : vector<1x384xf32>
    %666 = tpu.concatenate %333, %337, %661, %665 in 0 : vector<1x384xf32>, vector<1x384xf32>, vector<1x384xf32>, vector<1x384xf32> -> vector<4x384xf32>
    %c0_78 = arith.constant 0 : index
    %c0_79 = arith.constant 0 : index
    %667 = vector.load %arg3[%c0_78, %c0_79] : memref<4x384xf32, #tpu.memory_space<vmem>>, vector<4x384xf32>
    tpu.vector_store %arg3[%c0_78, %c0_79], %666 {strides = array<i32>} : memref<4x384xf32, #tpu.memory_space<vmem>>, vector<4x384xf32>,
    return
  }
}

</mosaic_0001>

<llo_original>
// kernel: posenet_forward.1
$region0: #{posenet_forward.1}
  #allocation0 [shape = 'u32[]', space=smem, size = 0x4, offset = 0x4, fixed_abs, tag = 'smem constant byte address 0x4 - core index']
  #allocation1 [shape = 'u32[144,128]{1,0:T(1,128)}', space=vmem, size = 0x12000, scoped, tag = 'internal scratch']
  %s0 = inlined_call_operand.vmem [shape: f32[8,450], index: 0, kind: input, shape index: {}]
  %s1 = inlined_call_operand.vmem [shape: f32[72], index: 1, kind: input, shape index: {}]
  %s2 = inlined_call_operand.vmem [shape: f32[2], index: 2, kind: input, shape index: {}]
  %s3 = inlined_call_operand.vmem [shape: f32[4,384], index: 3, kind: output, shape index: {}]
  %s4 = sld [smem:[#allocation0]]
  $region30: #{posenet_forward.1} parent=0
    _
  %s6 = ssub.s32 1, %s4
  %s7 = scalar_select 0, %s6, %s4
  $region1: #{posenet_forward.1} parent=0
    #allocation2 [shape = 'u8[512]{0}', space=smem, size = 0x200, scoped, tag = 'input window, operand 1, single buffered']
    #allocation3 [shape = 's32[1]{0}', space=sflag, size = 0x4, scoped, tag = 'scoped memory for posenet_forward.1']
    #allocation4 [shape = 'u8[512]{0}', space=smem, size = 0x200, scoped, tag = 'input window, operand 2, single buffered']
    #allocation5 [shape = 's32[1]{0}', space=sflag, size = 0x4, scoped, tag = 'scoped memory for posenet_forward.1']
    %8 = vsyncpa [#allocation3], 0
    %9 = vsyncpa [#allocation5], 0
    // Predicated region
    $region2: #{posenet_forward.1} parent=1 // pred_check
      _
    $region3: #{posenet_forward.1} parent=1 // pred_check_branch
      %11 = sbr.rel (0) target = $region5
    $region4: #{posenet_forward.1} parent=1 // pred_region
      _
    $region5: #{posenet_forward.1} parent=1 // pred_fallthru
      _
    // Predicated region
    $region6: #{posenet_forward.1} parent=1 // pred_check
      _
    $region7: #{posenet_forward.1} parent=1 // pred_check_branch
      %13 = sbr.rel (0) target = $region9
    $region8: #{posenet_forward.1} parent=1 // pred_region
      %s15 = ssub.s32 16, 16
      %16 = vsyncadd [#allocation3], %s15
      %s18 = sshll.u32 %s1, 4
      %s19 = int_to_ptr.vmem [resolvable:$true] %s18
      %21 = dma.vmem_to_smem %s19, 16, [#allocation2], [#allocation3]
    $region9: #{posenet_forward.1} parent=1 // pred_fallthru
      _
    // Predicated region
    $region10: #{posenet_forward.1} parent=1 // pred_check
      _
    $region11: #{posenet_forward.1} parent=1 // pred_check_branch
      %23 = sbr.rel (0) target = $region13
    $region12: #{posenet_forward.1} parent=1 // pred_region
      %s25 = ssub.s32 16, 16
      %26 = vsyncadd [#allocation5], %s25
      %s28 = sshll.u32 %s2, 4
      %s29 = int_to_ptr.vmem [resolvable:$true] %s28
      %31 = dma.vmem_to_smem %s29, 16, [#allocation4], [#allocation5]
    $region13: #{posenet_forward.1} parent=1 // pred_fallthru
      _
    // Predicated region
    $region14: #{posenet_forward.1} parent=1 // pred_check
      _
    $region15: #{posenet_forward.1} parent=1 // pred_check_branch
      %33 = sbr.rel (0) target = $region17
    $region16: #{posenet_forward.1} parent=1 // pred_region
      %34 = dma.done [#allocation3], 16
    $region17: #{posenet_forward.1} parent=1 // pred_fallthru
      _
    // Predicated region
    $region18: #{posenet_forward.1} parent=1 // pred_check
      _
    $region19: #{posenet_forward.1} parent=1 // pred_check_branch
      %36 = sbr.rel (0) target = $region21
    $region20: #{posenet_forward.1} parent=1 // pred_region
      %37 = dma.done [#allocation5], 16
    $region21: #{posenet_forward.1} parent=1 // pred_fallthru
      _
    %38 = sfence
    %v39 = vld [vmem:[%s0] sm:$0xff]
    %v40 = vld [vmem:[%s0 + $0x8] sm:$0xff]
    %v41 = vld [vmem:[%s0 + $0x10] sm:$0xff]
    %v42 = vld [vmem:[%s0 + $0x18] sm:$0xff]
    %s43 = sld [smem:[#allocation4]]
    %v44 = vstv %s43
    %s45 = sld [smem:[#allocation4 + $0x1]]
    %v46 = vstv %s45
    %s47 = sld [smem:[#allocation2]]
    %v48 = vstv %s47
    %v49 = vmul.f32 %v48, %v39
    %v50 = vmul.f32 %v48, %v40
    %v51 = vmul.f32 %v48, %v41
    %v52 = vmul.f32 %v48, %v42
    %v53 = vadd.f32 %v44, %v49
    %v54 = vadd.f32 %v44, %v50
    %v55 = vadd.f32 %v44, %v51
    %v56 = vadd.f32 %v44, %v52
    %s57 = sld [smem:[#allocation2 + $0x24]]
    %v58 = vstv %s57
    %v59 = vmul.f32 %v58, %v39
    %v60 = vmul.f32 %v58, %v40
    %v61 = vmul.f32 %v58, %v41
    %v62 = vmul.f32 %v58, %v42
    %v63 = vadd.f32 %v46, %v59
    %v64 = vadd.f32 %v46, %v60
    %v65 = vadd.f32 %v46, %v61
    %v66 = vadd.f32 %v46, %v62
    %s67 = sld [smem:[#allocation2 + $0x1]]
    %v68 = vstv %s67
    %v69 = vmul.f32 %v68, %v39
    %v70 = vmul.f32 %v68, %v40
    %v71 = vmul.f32 %v68, %v41
    %v72 = vmul.f32 %v68, %v42
    %77 = vrot.lane.b32.xlu0 %v69, 127
    %v78 = vpop.permute.xlu0 %77
    %79 = vrot.lane.b32.xlu0 %v70, 127
    %v80 = vpop.permute.xlu0 %79
    %81 = vrot.lane.b32.xlu0 %v71, 127
    %v82 = vpop.permute.xlu0 %81
    %83 = vrot.lane.b32.xlu0 %v72, 127
    %v84 = vpop.permute.xlu0 %83
    %vm85 = vcmask 1039360
    %v86 = vsel %vm85, %v78, %v80
    %v87 = vsel %vm85, %v80, %v82
    %v88 = vsel %vm85, %v82, %v84
    %v93 = vadd.f32 %v53, %v86
    %v94 = vadd.f32 %v54, %v87
    %v95 = vadd.f32 %v55, %v88
    %v96 = vadd.f32 %v56, %v84
    %s97 = sld [smem:[#allocation2 + $0x25]]
    %v98 = vstv %s97
    %v99 = vmul.f32 %v98, %v39
    %v100 = vmul.f32 %v98, %v40
    %v101 = vmul.f32 %v98, %v41
    %v102 = vmul.f32 %v98, %v42
    %107 = vrot.lane.b32.xlu0 %v99, 127
    %v108 = vpop.permute.xlu0 %107
    %109 = vrot.lane.b32.xlu0 %v100, 127
    %v110 = vpop.permute.xlu0 %109
    %111 = vrot.lane.b32.xlu0 %v101, 127
    %v112 = vpop.permute.xlu0 %111
    %113 = vrot.lane.b32.xlu0 %v102, 127
    %v114 = vpop.permute.xlu0 %113
    %v115 = vsel %vm85, %v108, %v110
    %v116 = vsel %vm85, %v110, %v112
    %v117 = vsel %vm85, %v112, %v114
    %v122 = vadd.f32 %v63, %v115
    %v123 = vadd.f32 %v64, %v116
    %v124 = vadd.f32 %v65, %v117
    %v125 = vadd.f32 %v66, %v114
    %s126 = sld [smem:[#allocation2 + $0x2]]
    %v127 = vstv %s126
    %v128 = vmul.f32 %v127, %v39
    %v129 = vmul.f32 %v127, %v40
    %v130 = vmul.f32 %v127, %v41
    %v131 = vmul.f32 %v127, %v42
    %136 = vrot.lane.b32.xlu0 %v128, 126
    %v137 = vpop.permute.xlu0 %136
    %138 = vrot.lane.b32.xlu0 %v129, 126
    %v139 = vpop.permute.xlu0 %138
    %140 = vrot.lane.b32.xlu0 %v130, 126
    %v141 = vpop.permute.xlu0 %140
    %142 = vrot.lane.b32.xlu0 %v131, 126
    %v143 = vpop.permute.xlu0 %142
    %vm144 = vcmask 1031168
    %v145 = vsel %vm144, %v137, %v139
    %v146 = vsel %vm144, %v139, %v141
    %v147 = vsel %vm144, %v141, %v143
    %v152 = vadd.f32 %v93, %v145
    %v153 = vadd.f32 %v94, %v146
    %v154 = vadd.f32 %v95, %v147
    %v155 = vadd.f32 %v96, %v143
    %s156 = sld [smem:[#allocation2 + $0x26]]
    %v157 = vstv %s156
    %v158 = vmul.f32 %v157, %v39
    %v159 = vmul.f32 %v157, %v40
    %v160 = vmul.f32 %v157, %v41
    %v161 = vmul.f32 %v157, %v42
    %166 = vrot.lane.b32.xlu0 %v158, 126
    %v167 = vpop.permute.xlu0 %166
    %168 = vrot.lane.b32.xlu0 %v159, 126
    %v169 = vpop.permute.xlu0 %168
    %170 = vrot.lane.b32.xlu0 %v160, 126
    %v171 = vpop.permute.xlu0 %170
    %172 = vrot.lane.b32.xlu0 %v161, 126
    %v173 = vpop.permute.xlu0 %172
    %v174 = vsel %vm144, %v167, %v169
    %v175 = vsel %vm144, %v169, %v171
    %v176 = vsel %vm144, %v171, %v173
    %v181 = vadd.f32 %v122, %v174
    %v182 = vadd.f32 %v123, %v175
    %v183 = vadd.f32 %v124, %v176
    %v184 = vadd.f32 %v125, %v173
    %s185 = sld [smem:[#allocation2 + $0x3]]
    %v186 = vstv %s185
    %v187 = vmul.f32 %v186, %v39
    %v188 = vmul.f32 %v186, %v40
    %v189 = vmul.f32 %v186, %v41
    %v190 = vmul.f32 %v186, %v42
    %195 = vrot.lane.b32.xlu0 %v187, 110
    %v196 = vpop.permute.xlu0 %195
    %197 = vrot.lane.b32.xlu0 %v188, 110
    %v198 = vpop.permute.xlu0 %197
    %199 = vrot.lane.b32.xlu0 %v189, 110
    %v200 = vpop.permute.xlu0 %199
    %201 = vrot.lane.b32.xlu0 %v190, 110
    %v202 = vpop.permute.xlu0 %201
    %vm203 = vcmask 900096
    %v204 = vsel %vm203, %v196, %v198
    %v205 = vsel %vm203, %v198, %v200
    %v206 = vsel %vm203, %v200, %v202
    %v211 = vadd.f32 %v152, %v204
    %v212 = vadd.f32 %v153, %v205
    %v213 = vadd.f32 %v154, %v206
    %v214 = vadd.f32 %v155, %v202
    %s215 = sld [smem:[#allocation2 + $0x27]]
    %v216 = vstv %s215
    %v217 = vmul.f32 %v216, %v39
    %v218 = vmul.f32 %v216, %v40
    %v219 = vmul.f32 %v216, %v41
    %v220 = vmul.f32 %v216, %v42
    %225 = vrot.lane.b32.xlu0 %v217, 110
    %v226 = vpop.permute.xlu0 %225
    %227 = vrot.lane.b32.xlu0 %v218, 110
    %v228 = vpop.permute.xlu0 %227
    %229 = vrot.lane.b32.xlu0 %v219, 110
    %v230 = vpop.permute.xlu0 %229
    %231 = vrot.lane.b32.xlu0 %v220, 110
    %v232 = vpop.permute.xlu0 %231
    %v233 = vsel %vm203, %v226, %v228
    %v234 = vsel %vm203, %v228, %v230
    %v235 = vsel %vm203, %v230, %v232
    %v240 = vadd.f32 %v181, %v233
    %v241 = vadd.f32 %v182, %v234
    %v242 = vadd.f32 %v183, %v235
    %v243 = vadd.f32 %v184, %v232
    %s244 = sld [smem:[#allocation2 + $0x4]]
    %v245 = vstv %s244
    %v246 = vmul.f32 %v245, %v39
    %v247 = vmul.f32 %v245, %v40
    %v248 = vmul.f32 %v245, %v41
    %v249 = vmul.f32 %v245, %v42
    %254 = vrot.lane.b32.xlu0 %v246, 109
    %v255 = vpop.permute.xlu0 %254
    %256 = vrot.lane.b32.xlu0 %v247, 109
    %v257 = vpop.permute.xlu0 %256
    %258 = vrot.lane.b32.xlu0 %v248, 109
    %v259 = vpop.permute.xlu0 %258
    %260 = vrot.lane.b32.xlu0 %v249, 109
    %v261 = vpop.permute.xlu0 %260
    %vm262 = vcmask 891904
    %v263 = vsel %vm262, %v255, %v257
    %v264 = vsel %vm262, %v257, %v259
    %v265 = vsel %vm262, %v259, %v261
    %v270 = vadd.f32 %v211, %v263
    %v271 = vadd.f32 %v212, %v264
    %v272 = vadd.f32 %v213, %v265
    %v273 = vadd.f32 %v214, %v261
    %s274 = sld [smem:[#allocation2 + $0x28]]
    %v275 = vstv %s274
    %v276 = vmul.f32 %v275, %v39
    %v277 = vmul.f32 %v275, %v40
    %v278 = vmul.f32 %v275, %v41
    %v279 = vmul.f32 %v275, %v42
    %284 = vrot.lane.b32.xlu0 %v276, 109
    %v285 = vpop.permute.xlu0 %284
    %286 = vrot.lane.b32.xlu0 %v277, 109
    %v287 = vpop.permute.xlu0 %286
    %288 = vrot.lane.b32.xlu0 %v278, 109
    %v289 = vpop.permute.xlu0 %288
    %290 = vrot.lane.b32.xlu0 %v279, 109
    %v291 = vpop.permute.xlu0 %290
    %v292 = vsel %vm262, %v285, %v287
    %v293 = vsel %vm262, %v287, %v289
    %v294 = vsel %vm262, %v289, %v291
    %v299 = vadd.f32 %v240, %v292
    %v300 = vadd.f32 %v241, %v293
    %v301 = vadd.f32 %v242, %v294
    %v302 = vadd.f32 %v243, %v291
    %s303 = sld [smem:[#allocation2 + $0x5]]
    %v304 = vstv %s303
    %v305 = vmul.f32 %v304, %v39
    %v306 = vmul.f32 %v304, %v40
    %v307 = vmul.f32 %v304, %v41
    %v308 = vmul.f32 %v304, %v42
    %313 = vrot.lane.b32.xlu0 %v305, 108
    %v314 = vpop.permute.xlu0 %313
    %315 = vrot.lane.b32.xlu0 %v306, 108
    %v316 = vpop.permute.xlu0 %315
    %317 = vrot.lane.b32.xlu0 %v307, 108
    %v318 = vpop.permute.xlu0 %317
    %319 = vrot.lane.b32.xlu0 %v308, 108
    %v320 = vpop.permute.xlu0 %319
    %vm321 = vcmask 883712
    %v322 = vsel %vm321, %v314, %v316
    %v323 = vsel %vm321, %v316, %v318
    %v324 = vsel %vm321, %v318, %v320
    %v329 = vadd.f32 %v270, %v322
    %v330 = vadd.f32 %v271, %v323
    %v331 = vadd.f32 %v272, %v324
    %v332 = vadd.f32 %v273, %v320
    %s333 = sld [smem:[#allocation2 + $0x29]]
    %v334 = vstv %s333
    %v335 = vmul.f32 %v334, %v39
    %v336 = vmul.f32 %v334, %v40
    %v337 = vmul.f32 %v334, %v41
    %v338 = vmul.f32 %v334, %v42
    %343 = vrot.lane.b32.xlu0 %v335, 108
    %v344 = vpop.permute.xlu0 %343
    %345 = vrot.lane.b32.xlu0 %v336, 108
    %v346 = vpop.permute.xlu0 %345
    %347 = vrot.lane.b32.xlu0 %v337, 108
    %v348 = vpop.permute.xlu0 %347
    %349 = vrot.lane.b32.xlu0 %v338, 108
    %v350 = vpop.permute.xlu0 %349
    %v351 = vsel %vm321, %v344, %v346
    %v352 = vsel %vm321, %v346, %v348
    %v353 = vsel %vm321, %v348, %v350
    %v358 = vadd.f32 %v299, %v351
    %v359 = vadd.f32 %v300, %v352
    %v360 = vadd.f32 %v301, %v353
    %v361 = vadd.f32 %v302, %v350
    %s362 = sld [smem:[#allocation2 + $0x6]]
    %v363 = vstv %s362
    %v364 = vmul.f32 %v363, %v39
    %v365 = vmul.f32 %v363, %v40
    %v366 = vmul.f32 %v363, %v41
    %v367 = vmul.f32 %v363, %v42
    %372 = vrot.lane.b32.xlu0 %v364, 92
    %v373 = vpop.permute.xlu0 %372
    %374 = vrot.lane.b32.xlu0 %v365, 92
    %v375 = vpop.permute.xlu0 %374
    %376 = vrot.lane.b32.xlu0 %v366, 92
    %v377 = vpop.permute.xlu0 %376
    %378 = vrot.lane.b32.xlu0 %v367, 92
    %v379 = vpop.permute.xlu0 %378
    %vm380 = vcmask 752640
    %v381 = vsel %vm380, %v373, %v375
    %v382 = vsel %vm380, %v375, %v377
    %v383 = vsel %vm380, %v377, %v379
    %v388 = vadd.f32 %v329, %v381
    %v389 = vadd.f32 %v330, %v382
    %v390 = vadd.f32 %v331, %v383
    %v391 = vadd.f32 %v332, %v379
    %s392 = sld [smem:[#allocation2 + $0x2a]]
    %v393 = vstv %s392
    %v394 = vmul.f32 %v393, %v39
    %v395 = vmul.f32 %v393, %v40
    %v396 = vmul.f32 %v393, %v41
    %v397 = vmul.f32 %v393, %v42
    %402 = vrot.lane.b32.xlu0 %v394, 92
    %v403 = vpop.permute.xlu0 %402
    %404 = vrot.lane.b32.xlu0 %v395, 92
    %v405 = vpop.permute.xlu0 %404
    %406 = vrot.lane.b32.xlu0 %v396, 92
    %v407 = vpop.permute.xlu0 %406
    %408 = vrot.lane.b32.xlu0 %v397, 92
    %v409 = vpop.permute.xlu0 %408
    %v410 = vsel %vm380, %v403, %v405
    %v411 = vsel %vm380, %v405, %v407
    %v412 = vsel %vm380, %v407, %v409
    %v417 = vadd.f32 %v358, %v410
    %v418 = vadd.f32 %v359, %v411
    %v419 = vadd.f32 %v360, %v412
    %v420 = vadd.f32 %v361, %v409
    %s421 = sld [smem:[#allocation2 + $0x7]]
    %v422 = vstv %s421
    %v423 = vmul.f32 %v422, %v39
    %v424 = vmul.f32 %v422, %v40
    %v425 = vmul.f32 %v422, %v41
    %v426 = vmul.f32 %v422, %v42
    %431 = vrot.lane.b32.xlu0 %v423, 91
    %v432 = vpop.permute.xlu0 %431
    %433 = vrot.lane.b32.xlu0 %v424, 91
    %v434 = vpop.permute.xlu0 %433
    %435 = vrot.lane.b32.xlu0 %v425, 91
    %v436 = vpop.permute.xlu0 %435
    %437 = vrot.lane.b32.xlu0 %v426, 91
    %v438 = vpop.permute.xlu0 %437
    %vm439 = vcmask 744448
    %v440 = vsel %vm439, %v432, %v434
    %v441 = vsel %vm439, %v434, %v436
    %v442 = vsel %vm439, %v436, %v438
    %v447 = vadd.f32 %v388, %v440
    %v448 = vadd.f32 %v389, %v441
    %v449 = vadd.f32 %v390, %v442
    %v450 = vadd.f32 %v391, %v438
    %s451 = sld [smem:[#allocation2 + $0x2b]]
    %v452 = vstv %s451
    %v453 = vmul.f32 %v452, %v39
    %v454 = vmul.f32 %v452, %v40
    %v455 = vmul.f32 %v452, %v41
    %v456 = vmul.f32 %v452, %v42
    %461 = vrot.lane.b32.xlu0 %v453, 91
    %v462 = vpop.permute.xlu0 %461
    %463 = vrot.lane.b32.xlu0 %v454, 91
    %v464 = vpop.permute.xlu0 %463
    %465 = vrot.lane.b32.xlu0 %v455, 91
    %v466 = vpop.permute.xlu0 %465
    %467 = vrot.lane.b32.xlu0 %v456, 91
    %v468 = vpop.permute.xlu0 %467
    %v469 = vsel %vm439, %v462, %v464
    %v470 = vsel %vm439, %v464, %v466
    %v471 = vsel %vm439, %v466, %v468
    %v476 = vadd.f32 %v417, %v469
    %v477 = vadd.f32 %v418, %v470
    %v478 = vadd.f32 %v419, %v471
    %v479 = vadd.f32 %v420, %v468
    %s480 = sld [smem:[#allocation2 + $0x8]]
    %v481 = vstv %s480
    %v482 = vmul.f32 %v481, %v39
    %v483 = vmul.f32 %v481, %v40
    %v484 = vmul.f32 %v481, %v41
    %v485 = vmul.f32 %v481, %v42
    %490 = vrot.lane.b32.xlu0 %v482, 90
    %v491 = vpop.permute.xlu0 %490
    %492 = vrot.lane.b32.xlu0 %v483, 90
    %v493 = vpop.permute.xlu0 %492
    %494 = vrot.lane.b32.xlu0 %v484, 90
    %v495 = vpop.permute.xlu0 %494
    %496 = vrot.lane.b32.xlu0 %v485, 90
    %v497 = vpop.permute.xlu0 %496
    %vm498 = vcmask 736256
    %v499 = vsel %vm498, %v491, %v493
    %v500 = vsel %vm498, %v493, %v495
    %v501 = vsel %vm498, %v495, %v497
    %v506 = vadd.f32 %v447, %v499
    %v507 = vadd.f32 %v448, %v500
    %v508 = vadd.f32 %v449, %v501
    %v509 = vadd.f32 %v450, %v497
    %s510 = sld [smem:[#allocation2 + $0x2c]]
    %v511 = vstv %s510
    %v512 = vmul.f32 %v511, %v39
    %v513 = vmul.f32 %v511, %v40
    %v514 = vmul.f32 %v511, %v41
    %v515 = vmul.f32 %v511, %v42
    %520 = vrot.lane.b32.xlu0 %v512, 90
    %v521 = vpop.permute.xlu0 %520
    %522 = vrot.lane.b32.xlu0 %v513, 90
    %v523 = vpop.permute.xlu0 %522
    %524 = vrot.lane.b32.xlu0 %v514, 90
    %v525 = vpop.permute.xlu0 %524
    %526 = vrot.lane.b32.xlu0 %v515, 90
    %v527 = vpop.permute.xlu0 %526
    %v528 = vsel %vm498, %v521, %v523
    %v529 = vsel %vm498, %v523, %v525
    %v530 = vsel %vm498, %v525, %v527
    %v535 = vadd.f32 %v476, %v528
    %v536 = vadd.f32 %v477, %v529
    %v537 = vadd.f32 %v478, %v530
    %v538 = vadd.f32 %v479, %v527
    %s539 = sld [smem:[#allocation2 + $0x9]]
    %v540 = vstv %s539
    %v541 = vmul.f32 %v540, %v39
    %v542 = vmul.f32 %v540, %v40
    %v543 = vmul.f32 %v540, %v41
    %v544 = vmul.f32 %v540, %v42
    %v549 = vrot.slane %v541, 1
    %v550 = vrot.slane %v542, 1
    %v551 = vrot.slane %v543, 1
    %v552 = vrot.slane %v544, 1
    %v557 = vadd.f32 %v506, %v549
    %v558 = vadd.f32 %v507, %v550
    %v559 = vadd.f32 %v508, %v551
    %v560 = vadd.f32 %v509, %v552
    %s561 = sld [smem:[#allocation2 + $0x2d]]
    %v562 = vstv %s561
    %v563 = vmul.f32 %v562, %v39
    %v564 = vmul.f32 %v562, %v40
    %v565 = vmul.f32 %v562, %v41
    %v566 = vmul.f32 %v562, %v42
    %v571 = vrot.slane %v563, 1
    %v572 = vrot.slane %v564, 1
    %v573 = vrot.slane %v565, 1
    %v574 = vrot.slane %v566, 1
    %v579 = vadd.f32 %v535, %v571
    %v580 = vadd.f32 %v536, %v572
    %v581 = vadd.f32 %v537, %v573
    %v582 = vadd.f32 %v538, %v574
    %s583 = sld [smem:[#allocation2 + $0xa]]
    %v584 = vstv %s583
    %v585 = vmul.f32 %v584, %v39
    %v586 = vmul.f32 %v584, %v40
    %v587 = vmul.f32 %v584, %v41
    %v588 = vmul.f32 %v584, %v42
    %v593 = vrot.slane %v585, 1
    %v594 = vrot.slane %v586, 1
    %v595 = vrot.slane %v587, 1
    %v596 = vrot.slane %v588, 1
    %597 = vrot.lane.b32.xlu0 %v593, 127
    %v598 = vpop.permute.xlu0 %597
    %599 = vrot.lane.b32.xlu0 %v594, 127
    %v600 = vpop.permute.xlu0 %599
    %601 = vrot.lane.b32.xlu0 %v595, 127
    %v602 = vpop.permute.xlu0 %601
    %603 = vrot.lane.b32.xlu0 %v596, 127
    %v604 = vpop.permute.xlu0 %603
    %v605 = vsel %vm85, %v598, %v600
    %v606 = vsel %vm85, %v600, %v602
    %v607 = vsel %vm85, %v602, %v604
    %v612 = vadd.f32 %v557, %v605
    %v613 = vadd.f32 %v558, %v606
    %v614 = vadd.f32 %v559, %v607
    %v615 = vadd.f32 %v560, %v604
    %s616 = sld [smem:[#allocation2 + $0x2e]]
    %v617 = vstv %s616
    %v618 = vmul.f32 %v617, %v39
    %v619 = vmul.f32 %v617, %v40
    %v620 = vmul.f32 %v617, %v41
    %v621 = vmul.f32 %v617, %v42
    %v626 = vrot.slane %v618, 1
    %v627 = vrot.slane %v619, 1
    %v628 = vrot.slane %v620, 1
    %v629 = vrot.slane %v621, 1
    %630 = vrot.lane.b32.xlu0 %v626, 127
    %v631 = vpop.permute.xlu0 %630
    %632 = vrot.lane.b32.xlu0 %v627, 127
    %v633 = vpop.permute.xlu0 %632
    %634 = vrot.lane.b32.xlu0 %v628, 127
    %v635 = vpop.permute.xlu0 %634
    %636 = vrot.lane.b32.xlu0 %v629, 127
    %v637 = vpop.permute.xlu0 %636
    %v638 = vsel %vm85, %v631, %v633
    %v639 = vsel %vm85, %v633, %v635
    %v640 = vsel %vm85, %v635, %v637
    %v645 = vadd.f32 %v579, %v638
    %v646 = vadd.f32 %v580, %v639
    %v647 = vadd.f32 %v581, %v640
    %v648 = vadd.f32 %v582, %v637
    %s649 = sld [smem:[#allocation2 + $0xb]]
    %v650 = vstv %s649
    %v651 = vmul.f32 %v650, %v39
    %v652 = vmul.f32 %v650, %v40
    %v653 = vmul.f32 %v650, %v41
    %v654 = vmul.f32 %v650, %v42
    %v659 = vrot.slane %v651, 1
    %v660 = vrot.slane %v652, 1
    %v661 = vrot.slane %v653, 1
    %v662 = vrot.slane %v654, 1
    %663 = vrot.lane.b32.xlu0 %v659, 126
    %v664 = vpop.permute.xlu0 %663
    %665 = vrot.lane.b32.xlu0 %v660, 126
    %v666 = vpop.permute.xlu0 %665
    %667 = vrot.lane.b32.xlu0 %v661, 126
    %v668 = vpop.permute.xlu0 %667
    %669 = vrot.lane.b32.xlu0 %v662, 126
    %v670 = vpop.permute.xlu0 %669
    %v671 = vsel %vm144, %v664, %v666
    %v672 = vsel %vm144, %v666, %v668
    %v673 = vsel %vm144, %v668, %v670
    %v678 = vadd.f32 %v612, %v671
    %v679 = vadd.f32 %v613, %v672
    %v680 = vadd.f32 %v614, %v673
    %v681 = vadd.f32 %v615, %v670
    %s682 = sld [smem:[#allocation2 + $0x2f]]
    %v683 = vstv %s682
    %v684 = vmul.f32 %v683, %v39
    %v685 = vmul.f32 %v683, %v40
    %v686 = vmul.f32 %v683, %v41
    %v687 = vmul.f32 %v683, %v42
    %v692 = vrot.slane %v684, 1
    %v693 = vrot.slane %v685, 1
    %v694 = vrot.slane %v686, 1
    %v695 = vrot.slane %v687, 1
    %696 = vrot.lane.b32.xlu0 %v692, 126
    %v697 = vpop.permute.xlu0 %696
    %698 = vrot.lane.b32.xlu0 %v693, 126
    %v699 = vpop.permute.xlu0 %698
    %700 = vrot.lane.b32.xlu0 %v694, 126
    %v701 = vpop.permute.xlu0 %700
    %702 = vrot.lane.b32.xlu0 %v695, 126
    %v703 = vpop.permute.xlu0 %702
    %v704 = vsel %vm144, %v697, %v699
    %v705 = vsel %vm144, %v699, %v701
    %v706 = vsel %vm144, %v701, %v703
    %v711 = vadd.f32 %v645, %v704
    %v712 = vadd.f32 %v646, %v705
    %v713 = vadd.f32 %v647, %v706
    %v714 = vadd.f32 %v648, %v703
    %s715 = sld [smem:[#allocation2 + $0xc]]
    %v716 = vstv %s715
    %v717 = vmul.f32 %v716, %v39
    %v718 = vmul.f32 %v716, %v40
    %v719 = vmul.f32 %v716, %v41
    %v720 = vmul.f32 %v716, %v42
    %v725 = vrot.slane %v717, 1
    %v726 = vrot.slane %v718, 1
    %v727 = vrot.slane %v719, 1
    %v728 = vrot.slane %v720, 1
    %729 = vrot.lane.b32.xlu0 %v725, 110
    %v730 = vpop.permute.xlu0 %729
    %731 = vrot.lane.b32.xlu0 %v726, 110
    %v732 = vpop.permute.xlu0 %731
    %733 = vrot.lane.b32.xlu0 %v727, 110
    %v734 = vpop.permute.xlu0 %733
    %735 = vrot.lane.b32.xlu0 %v728, 110
    %v736 = vpop.permute.xlu0 %735
    %v737 = vsel %vm203, %v730, %v732
    %v738 = vsel %vm203, %v732, %v734
    %v739 = vsel %vm203, %v734, %v736
    %v744 = vadd.f32 %v678, %v737
    %v745 = vadd.f32 %v679, %v738
    %v746 = vadd.f32 %v680, %v739
    %v747 = vadd.f32 %v681, %v736
    %s748 = sld [smem:[#allocation2 + $0x30]]
    %v749 = vstv %s748
    %v750 = vmul.f32 %v749, %v39
    %v751 = vmul.f32 %v749, %v40
    %v752 = vmul.f32 %v749, %v41
    %v753 = vmul.f32 %v749, %v42
    %v758 = vrot.slane %v750, 1
    %v759 = vrot.slane %v751, 1
    %v760 = vrot.slane %v752, 1
    %v761 = vrot.slane %v753, 1
    %762 = vrot.lane.b32.xlu0 %v758, 110
    %v763 = vpop.permute.xlu0 %762
    %764 = vrot.lane.b32.xlu0 %v759, 110
    %v765 = vpop.permute.xlu0 %764
    %766 = vrot.lane.b32.xlu0 %v760, 110
    %v767 = vpop.permute.xlu0 %766
    %768 = vrot.lane.b32.xlu0 %v761, 110
    %v769 = vpop.permute.xlu0 %768
    %v770 = vsel %vm203, %v763, %v765
    %v771 = vsel %vm203, %v765, %v767
    %v772 = vsel %vm203, %v767, %v769
    %v777 = vadd.f32 %v711, %v770
    %v778 = vadd.f32 %v712, %v771
    %v779 = vadd.f32 %v713, %v772
    %v780 = vadd.f32 %v714, %v769
    %s781 = sld [smem:[#allocation2 + $0xd]]
    %v782 = vstv %s781
    %v783 = vmul.f32 %v782, %v39
    %v784 = vmul.f32 %v782, %v40
    %v785 = vmul.f32 %v782, %v41
    %v786 = vmul.f32 %v782, %v42
    %v791 = vrot.slane %v783, 1
    %v792 = vrot.slane %v784, 1
    %v793 = vrot.slane %v785, 1
    %v794 = vrot.slane %v786, 1
    %795 = vrot.lane.b32.xlu0 %v791, 109
    %v796 = vpop.permute.xlu0 %795
    %797 = vrot.lane.b32.xlu0 %v792, 109
    %v798 = vpop.permute.xlu0 %797
    %799 = vrot.lane.b32.xlu0 %v793, 109
    %v800 = vpop.permute.xlu0 %799
    %801 = vrot.lane.b32.xlu0 %v794, 109
    %v802 = vpop.permute.xlu0 %801
    %v803 = vsel %vm262, %v796, %v798
    %v804 = vsel %vm262, %v798, %v800
    %v805 = vsel %vm262, %v800, %v802
    %v810 = vadd.f32 %v744, %v803
    %v811 = vadd.f32 %v745, %v804
    %v812 = vadd.f32 %v746, %v805
    %v813 = vadd.f32 %v747, %v802
    %s814 = sld [smem:[#allocation2 + $0x31]]
    %v815 = vstv %s814
    %v816 = vmul.f32 %v815, %v39
    %v817 = vmul.f32 %v815, %v40
    %v818 = vmul.f32 %v815, %v41
    %v819 = vmul.f32 %v815, %v42
    %v824 = vrot.slane %v816, 1
    %v825 = vrot.slane %v817, 1
    %v826 = vrot.slane %v818, 1
    %v827 = vrot.slane %v819, 1
    %828 = vrot.lane.b32.xlu0 %v824, 109
    %v829 = vpop.permute.xlu0 %828
    %830 = vrot.lane.b32.xlu0 %v825, 109
    %v831 = vpop.permute.xlu0 %830
    %832 = vrot.lane.b32.xlu0 %v826, 109
    %v833 = vpop.permute.xlu0 %832
    %834 = vrot.lane.b32.xlu0 %v827, 109
    %v835 = vpop.permute.xlu0 %834
    %v836 = vsel %vm262, %v829, %v831
    %v837 = vsel %vm262, %v831, %v833
    %v838 = vsel %vm262, %v833, %v835
    %v843 = vadd.f32 %v777, %v836
    %v844 = vadd.f32 %v778, %v837
    %v845 = vadd.f32 %v779, %v838
    %v846 = vadd.f32 %v780, %v835
    %s847 = sld [smem:[#allocation2 + $0xe]]
    %v848 = vstv %s847
    %v849 = vmul.f32 %v848, %v39
    %v850 = vmul.f32 %v848, %v40
    %v851 = vmul.f32 %v848, %v41
    %v852 = vmul.f32 %v848, %v42
    %v857 = vrot.slane %v849, 1
    %v858 = vrot.slane %v850, 1
    %v859 = vrot.slane %v851, 1
    %v860 = vrot.slane %v852, 1
    %861 = vrot.lane.b32.xlu0 %v857, 108
    %v862 = vpop.permute.xlu0 %861
    %863 = vrot.lane.b32.xlu0 %v858, 108
    %v864 = vpop.permute.xlu0 %863
    %865 = vrot.lane.b32.xlu0 %v859, 108
    %v866 = vpop.permute.xlu0 %865
    %867 = vrot.lane.b32.xlu0 %v860, 108
    %v868 = vpop.permute.xlu0 %867
    %v869 = vsel %vm321, %v862, %v864
    %v870 = vsel %vm321, %v864, %v866
    %v871 = vsel %vm321, %v866, %v868
    %v876 = vadd.f32 %v810, %v869
    %v877 = vadd.f32 %v811, %v870
    %v878 = vadd.f32 %v812, %v871
    %v879 = vadd.f32 %v813, %v868
    %s880 = sld [smem:[#allocation2 + $0x32]]
    %v881 = vstv %s880
    %v882 = vmul.f32 %v881, %v39
    %v883 = vmul.f32 %v881, %v40
    %v884 = vmul.f32 %v881, %v41
    %v885 = vmul.f32 %v881, %v42
    %v890 = vrot.slane %v882, 1
    %v891 = vrot.slane %v883, 1
    %v892 = vrot.slane %v884, 1
    %v893 = vrot.slane %v885, 1
    %894 = vrot.lane.b32.xlu0 %v890, 108
    %v895 = vpop.permute.xlu0 %894
    %896 = vrot.lane.b32.xlu0 %v891, 108
    %v897 = vpop.permute.xlu0 %896
    %898 = vrot.lane.b32.xlu0 %v892, 108
    %v899 = vpop.permute.xlu0 %898
    %900 = vrot.lane.b32.xlu0 %v893, 108
    %v901 = vpop.permute.xlu0 %900
    %v902 = vsel %vm321, %v895, %v897
    %v903 = vsel %vm321, %v897, %v899
    %v904 = vsel %vm321, %v899, %v901
    %v909 = vadd.f32 %v843, %v902
    %v910 = vadd.f32 %v844, %v903
    %v911 = vadd.f32 %v845, %v904
    %v912 = vadd.f32 %v846, %v901
    %s913 = sld [smem:[#allocation2 + $0xf]]
    %v914 = vstv %s913
    %v915 = vmul.f32 %v914, %v39
    %v916 = vmul.f32 %v914, %v40
    %v917 = vmul.f32 %v914, %v41
    %v918 = vmul.f32 %v914, %v42
    %v923 = vrot.slane %v915, 1
    %v924 = vrot.slane %v916, 1
    %v925 = vrot.slane %v917, 1
    %v926 = vrot.slane %v918, 1
    %927 = vrot.lane.b32.xlu0 %v923, 92
    %v928 = vpop.permute.xlu0 %927
    %929 = vrot.lane.b32.xlu0 %v924, 92
    %v930 = vpop.permute.xlu0 %929
    %931 = vrot.lane.b32.xlu0 %v925, 92
    %v932 = vpop.permute.xlu0 %931
    %933 = vrot.lane.b32.xlu0 %v926, 92
    %v934 = vpop.permute.xlu0 %933
    %v935 = vsel %vm380, %v928, %v930
    %v936 = vsel %vm380, %v930, %v932
    %v937 = vsel %vm380, %v932, %v934
    %v942 = vadd.f32 %v876, %v935
    %v943 = vadd.f32 %v877, %v936
    %v944 = vadd.f32 %v878, %v937
    %v945 = vadd.f32 %v879, %v934
    %s946 = sld [smem:[#allocation2 + $0x33]]
    %v947 = vstv %s946
    %v948 = vmul.f32 %v947, %v39
    %v949 = vmul.f32 %v947, %v40
    %v950 = vmul.f32 %v947, %v41
    %v951 = vmul.f32 %v947, %v42
    %v956 = vrot.slane %v948, 1
    %v957 = vrot.slane %v949, 1
    %v958 = vrot.slane %v950, 1
    %v959 = vrot.slane %v951, 1
    %960 = vrot.lane.b32.xlu0 %v956, 92
    %v961 = vpop.permute.xlu0 %960
    %962 = vrot.lane.b32.xlu0 %v957, 92
    %v963 = vpop.permute.xlu0 %962
    %964 = vrot.lane.b32.xlu0 %v958, 92
    %v965 = vpop.permute.xlu0 %964
    %966 = vrot.lane.b32.xlu0 %v959, 92
    %v967 = vpop.permute.xlu0 %966
    %v968 = vsel %vm380, %v961, %v963
    %v969 = vsel %vm380, %v963, %v965
    %v970 = vsel %vm380, %v965, %v967
    %v975 = vadd.f32 %v909, %v968
    %v976 = vadd.f32 %v910, %v969
    %v977 = vadd.f32 %v911, %v970
    %v978 = vadd.f32 %v912, %v967
    %s979 = sld [smem:[#allocation2 + $0x10]]
    %v980 = vstv %s979
    %v981 = vmul.f32 %v980, %v39
    %v982 = vmul.f32 %v980, %v40
    %v983 = vmul.f32 %v980, %v41
    %v984 = vmul.f32 %v980, %v42
    %v989 = vrot.slane %v981, 1
    %v990 = vrot.slane %v982, 1
    %v991 = vrot.slane %v983, 1
    %v992 = vrot.slane %v984, 1
    %993 = vrot.lane.b32.xlu0 %v989, 91
    %v994 = vpop.permute.xlu0 %993
    %995 = vrot.lane.b32.xlu0 %v990, 91
    %v996 = vpop.permute.xlu0 %995
    %997 = vrot.lane.b32.xlu0 %v991, 91
    %v998 = vpop.permute.xlu0 %997
    %999 = vrot.lane.b32.xlu0 %v992, 91
    %v1000 = vpop.permute.xlu0 %999
    %v1001 = vsel %vm439, %v994, %v996
    %v1002 = vsel %vm439, %v996, %v998
    %v1003 = vsel %vm439, %v998, %v1000
    %v1008 = vadd.f32 %v942, %v1001
    %v1009 = vadd.f32 %v943, %v1002
    %v1010 = vadd.f32 %v944, %v1003
    %v1011 = vadd.f32 %v945, %v1000
    %s1012 = sld [smem:[#allocation2 + $0x34]]
    %v1013 = vstv %s1012
    %v1014 = vmul.f32 %v1013, %v39
    %v1015 = vmul.f32 %v1013, %v40
    %v1016 = vmul.f32 %v1013, %v41
    %v1017 = vmul.f32 %v1013, %v42
    %v1022 = vrot.slane %v1014, 1
    %v1023 = vrot.slane %v1015, 1
    %v1024 = vrot.slane %v1016, 1
    %v1025 = vrot.slane %v1017, 1
    %1026 = vrot.lane.b32.xlu0 %v1022, 91
    %v1027 = vpop.permute.xlu0 %1026
    %1028 = vrot.lane.b32.xlu0 %v1023, 91
    %v1029 = vpop.permute.xlu0 %1028
    %1030 = vrot.lane.b32.xlu0 %v1024, 91
    %v1031 = vpop.permute.xlu0 %1030
    %1032 = vrot.lane.b32.xlu0 %v1025, 91
    %v1033 = vpop.permute.xlu0 %1032
    %v1034 = vsel %vm439, %v1027, %v1029
    %v1035 = vsel %vm439, %v1029, %v1031
    %v1036 = vsel %vm439, %v1031, %v1033
    %v1041 = vadd.f32 %v975, %v1034
    %v1042 = vadd.f32 %v976, %v1035
    %v1043 = vadd.f32 %v977, %v1036
    %v1044 = vadd.f32 %v978, %v1033
    %s1045 = sld [smem:[#allocation2 + $0x11]]
    %v1046 = vstv %s1045
    %v1047 = vmul.f32 %v1046, %v39
    %v1048 = vmul.f32 %v1046, %v40
    %v1049 = vmul.f32 %v1046, %v41
    %v1050 = vmul.f32 %v1046, %v42
    %v1055 = vrot.slane %v1047, 1
    %v1056 = vrot.slane %v1048, 1
    %v1057 = vrot.slane %v1049, 1
    %v1058 = vrot.slane %v1050, 1
    %1059 = vrot.lane.b32.xlu0 %v1055, 90
    %v1060 = vpop.permute.xlu0 %1059
    %1061 = vrot.lane.b32.xlu0 %v1056, 90
    %v1062 = vpop.permute.xlu0 %1061
    %1063 = vrot.lane.b32.xlu0 %v1057, 90
    %v1064 = vpop.permute.xlu0 %1063
    %1065 = vrot.lane.b32.xlu0 %v1058, 90
    %v1066 = vpop.permute.xlu0 %1065
    %v1067 = vsel %vm498, %v1060, %v1062
    %v1068 = vsel %vm498, %v1062, %v1064
    %v1069 = vsel %vm498, %v1064, %v1066
    %v1074 = vadd.f32 %v1008, %v1067
    %v1075 = vadd.f32 %v1009, %v1068
    %v1076 = vadd.f32 %v1010, %v1069
    %v1077 = vadd.f32 %v1011, %v1066
    %s1078 = sld [smem:[#allocation2 + $0x35]]
    %v1079 = vstv %s1078
    %v1080 = vmul.f32 %v1079, %v39
    %v1081 = vmul.f32 %v1079, %v40
    %v1082 = vmul.f32 %v1079, %v41
    %v1083 = vmul.f32 %v1079, %v42
    %v1088 = vrot.slane %v1080, 1
    %v1089 = vrot.slane %v1081, 1
    %v1090 = vrot.slane %v1082, 1
    %v1091 = vrot.slane %v1083, 1
    %1092 = vrot.lane.b32.xlu0 %v1088, 90
    %v1093 = vpop.permute.xlu0 %1092
    %1094 = vrot.lane.b32.xlu0 %v1089, 90
    %v1095 = vpop.permute.xlu0 %1094
    %1096 = vrot.lane.b32.xlu0 %v1090, 90
    %v1097 = vpop.permute.xlu0 %1096
    %1098 = vrot.lane.b32.xlu0 %v1091, 90
    %v1099 = vpop.permute.xlu0 %1098
    %v1100 = vsel %vm498, %v1093, %v1095
    %v1101 = vsel %vm498, %v1095, %v1097
    %v1102 = vsel %vm498, %v1097, %v1099
    %v1107 = vadd.f32 %v1041, %v1100
    %v1108 = vadd.f32 %v1042, %v1101
    %v1109 = vadd.f32 %v1043, %v1102
    %v1110 = vadd.f32 %v1044, %v1099
    %s1111 = sld [smem:[#allocation2 + $0x12]]
    %v1112 = vstv %s1111
    %v1113 = vmul.f32 %v1112, %v39
    %v1114 = vmul.f32 %v1112, %v40
    %v1115 = vmul.f32 %v1112, %v41
    %v1116 = vmul.f32 %v1112, %v42
    %v1121 = vrot.slane %v1113, 2
    %v1122 = vrot.slane %v1114, 2
    %v1123 = vrot.slane %v1115, 2
    %v1124 = vrot.slane %v1116, 2
    %v1129 = vadd.f32 %v1074, %v1121
    %v1130 = vadd.f32 %v1075, %v1122
    %v1131 = vadd.f32 %v1076, %v1123
    %v1132 = vadd.f32 %v1077, %v1124
    %s1133 = sld [smem:[#allocation2 + $0x36]]
    %v1134 = vstv %s1133
    %v1135 = vmul.f32 %v1134, %v39
    %v1136 = vmul.f32 %v1134, %v40
    %v1137 = vmul.f32 %v1134, %v41
    %v1138 = vmul.f32 %v1134, %v42
    %v1143 = vrot.slane %v1135, 2
    %v1144 = vrot.slane %v1136, 2
    %v1145 = vrot.slane %v1137, 2
    %v1146 = vrot.slane %v1138, 2
    %v1151 = vadd.f32 %v1107, %v1143
    %v1152 = vadd.f32 %v1108, %v1144
    %v1153 = vadd.f32 %v1109, %v1145
    %v1154 = vadd.f32 %v1110, %v1146
    %s1155 = sld [smem:[#allocation2 + $0x13]]
    %v1156 = vstv %s1155
    %v1157 = vmul.f32 %v1156, %v39
    %v1158 = vmul.f32 %v1156, %v40
    %v1159 = vmul.f32 %v1156, %v41
    %v1160 = vmul.f32 %v1156, %v42
    %v1165 = vrot.slane %v1157, 2
    %v1166 = vrot.slane %v1158, 2
    %v1167 = vrot.slane %v1159, 2
    %v1168 = vrot.slane %v1160, 2
    %1169 = vrot.lane.b32.xlu0 %v1165, 127
    %v1170 = vpop.permute.xlu0 %1169
    %1171 = vrot.lane.b32.xlu0 %v1166, 127
    %v1172 = vpop.permute.xlu0 %1171
    %1173 = vrot.lane.b32.xlu0 %v1167, 127
    %v1174 = vpop.permute.xlu0 %1173
    %1175 = vrot.lane.b32.xlu0 %v1168, 127
    %v1176 = vpop.permute.xlu0 %1175
    %v1177 = vsel %vm85, %v1170, %v1172
    %v1178 = vsel %vm85, %v1172, %v1174
    %v1179 = vsel %vm85, %v1174, %v1176
    %v1184 = vadd.f32 %v1129, %v1177
    %v1185 = vadd.f32 %v1130, %v1178
    %v1186 = vadd.f32 %v1131, %v1179
    %v1187 = vadd.f32 %v1132, %v1176
    %s1188 = sld [smem:[#allocation2 + $0x37]]
    %v1189 = vstv %s1188
    %v1190 = vmul.f32 %v1189, %v39
    %v1191 = vmul.f32 %v1189, %v40
    %v1192 = vmul.f32 %v1189, %v41
    %v1193 = vmul.f32 %v1189, %v42
    %v1198 = vrot.slane %v1190, 2
    %v1199 = vrot.slane %v1191, 2
    %v1200 = vrot.slane %v1192, 2
    %v1201 = vrot.slane %v1193, 2
    %1202 = vrot.lane.b32.xlu0 %v1198, 127
    %v1203 = vpop.permute.xlu0 %1202
    %1204 = vrot.lane.b32.xlu0 %v1199, 127
    %v1205 = vpop.permute.xlu0 %1204
    %1206 = vrot.lane.b32.xlu0 %v1200, 127
    %v1207 = vpop.permute.xlu0 %1206
    %1208 = vrot.lane.b32.xlu0 %v1201, 127
    %v1209 = vpop.permute.xlu0 %1208
    %v1210 = vsel %vm85, %v1203, %v1205
    %v1211 = vsel %vm85, %v1205, %v1207
    %v1212 = vsel %vm85, %v1207, %v1209
    %v1217 = vadd.f32 %v1151, %v1210
    %v1218 = vadd.f32 %v1152, %v1211
    %v1219 = vadd.f32 %v1153, %v1212
    %v1220 = vadd.f32 %v1154, %v1209
    %s1221 = sld [smem:[#allocation2 + $0x14]]
    %v1222 = vstv %s1221
    %v1223 = vmul.f32 %v1222, %v39
    %v1224 = vmul.f32 %v1222, %v40
    %v1225 = vmul.f32 %v1222, %v41
    %v1226 = vmul.f32 %v1222, %v42
    %v1231 = vrot.slane %v1223, 2
    %v1232 = vrot.slane %v1224, 2
    %v1233 = vrot.slane %v1225, 2
    %v1234 = vrot.slane %v1226, 2
    %1235 = vrot.lane.b32.xlu0 %v1231, 126
    %v1236 = vpop.permute.xlu0 %1235
    %1237 = vrot.lane.b32.xlu0 %v1232, 126
    %v1238 = vpop.permute.xlu0 %1237
    %1239 = vrot.lane.b32.xlu0 %v1233, 126
    %v1240 = vpop.permute.xlu0 %1239
    %1241 = vrot.lane.b32.xlu0 %v1234, 126
    %v1242 = vpop.permute.xlu0 %1241
    %v1243 = vsel %vm144, %v1236, %v1238
    %v1244 = vsel %vm144, %v1238, %v1240
    %v1245 = vsel %vm144, %v1240, %v1242
    %v1250 = vadd.f32 %v1184, %v1243
    %v1251 = vadd.f32 %v1185, %v1244
    %v1252 = vadd.f32 %v1186, %v1245
    %v1253 = vadd.f32 %v1187, %v1242
    %s1254 = sld [smem:[#allocation2 + $0x38]]
    %v1255 = vstv %s1254
    %v1256 = vmul.f32 %v1255, %v39
    %v1257 = vmul.f32 %v1255, %v40
    %v1258 = vmul.f32 %v1255, %v41
    %v1259 = vmul.f32 %v1255, %v42
    %v1264 = vrot.slane %v1256, 2
    %v1265 = vrot.slane %v1257, 2
    %v1266 = vrot.slane %v1258, 2
    %v1267 = vrot.slane %v1259, 2
    %1268 = vrot.lane.b32.xlu0 %v1264, 126
    %v1269 = vpop.permute.xlu0 %1268
    %1270 = vrot.lane.b32.xlu0 %v1265, 126
    %v1271 = vpop.permute.xlu0 %1270
    %1272 = vrot.lane.b32.xlu0 %v1266, 126
    %v1273 = vpop.permute.xlu0 %1272
    %1274 = vrot.lane.b32.xlu0 %v1267, 126
    %v1275 = vpop.permute.xlu0 %1274
    %v1276 = vsel %vm144, %v1269, %v1271
    %v1277 = vsel %vm144, %v1271, %v1273
    %v1278 = vsel %vm144, %v1273, %v1275
    %v1283 = vadd.f32 %v1217, %v1276
    %v1284 = vadd.f32 %v1218, %v1277
    %v1285 = vadd.f32 %v1219, %v1278
    %v1286 = vadd.f32 %v1220, %v1275
    %s1287 = sld [smem:[#allocation2 + $0x15]]
    %v1288 = vstv %s1287
    %v1289 = vmul.f32 %v1288, %v39
    %v1290 = vmul.f32 %v1288, %v40
    %v1291 = vmul.f32 %v1288, %v41
    %v1292 = vmul.f32 %v1288, %v42
    %v1297 = vrot.slane %v1289, 2
    %v1298 = vrot.slane %v1290, 2
    %v1299 = vrot.slane %v1291, 2
    %v1300 = vrot.slane %v1292, 2
    %1301 = vrot.lane.b32.xlu0 %v1297, 110
    %v1302 = vpop.permute.xlu0 %1301
    %1303 = vrot.lane.b32.xlu0 %v1298, 110
    %v1304 = vpop.permute.xlu0 %1303
    %1305 = vrot.lane.b32.xlu0 %v1299, 110
    %v1306 = vpop.permute.xlu0 %1305
    %1307 = vrot.lane.b32.xlu0 %v1300, 110
    %v1308 = vpop.permute.xlu0 %1307
    %v1309 = vsel %vm203, %v1302, %v1304
    %v1310 = vsel %vm203, %v1304, %v1306
    %v1311 = vsel %vm203, %v1306, %v1308
    %v1316 = vadd.f32 %v1250, %v1309
    %v1317 = vadd.f32 %v1251, %v1310
    %v1318 = vadd.f32 %v1252, %v1311
    %v1319 = vadd.f32 %v1253, %v1308
    %s1320 = sld [smem:[#allocation2 + $0x39]]
    %v1321 = vstv %s1320
    %v1322 = vmul.f32 %v1321, %v39
    %v1323 = vmul.f32 %v1321, %v40
    %v1324 = vmul.f32 %v1321, %v41
    %v1325 = vmul.f32 %v1321, %v42
    %v1330 = vrot.slane %v1322, 2
    %v1331 = vrot.slane %v1323, 2
    %v1332 = vrot.slane %v1324, 2
    %v1333 = vrot.slane %v1325, 2
    %1334 = vrot.lane.b32.xlu0 %v1330, 110
    %v1335 = vpop.permute.xlu0 %1334
    %1336 = vrot.lane.b32.xlu0 %v1331, 110
    %v1337 = vpop.permute.xlu0 %1336
    %1338 = vrot.lane.b32.xlu0 %v1332, 110
    %v1339 = vpop.permute.xlu0 %1338
    %1340 = vrot.lane.b32.xlu0 %v1333, 110
    %v1341 = vpop.permute.xlu0 %1340
    %v1342 = vsel %vm203, %v1335, %v1337
    %v1343 = vsel %vm203, %v1337, %v1339
    %v1344 = vsel %vm203, %v1339, %v1341
    %v1349 = vadd.f32 %v1283, %v1342
    %v1350 = vadd.f32 %v1284, %v1343
    %v1351 = vadd.f32 %v1285, %v1344
    %v1352 = vadd.f32 %v1286, %v1341
    %s1353 = sld [smem:[#allocation2 + $0x16]]
    %v1354 = vstv %s1353
    %v1355 = vmul.f32 %v1354, %v39
    %v1356 = vmul.f32 %v1354, %v40
    %v1357 = vmul.f32 %v1354, %v41
    %v1358 = vmul.f32 %v1354, %v42
    %v1363 = vrot.slane %v1355, 2
    %v1364 = vrot.slane %v1356, 2
    %v1365 = vrot.slane %v1357, 2
    %v1366 = vrot.slane %v1358, 2
    %1367 = vrot.lane.b32.xlu0 %v1363, 109
    %v1368 = vpop.permute.xlu0 %1367
    %1369 = vrot.lane.b32.xlu0 %v1364, 109
    %v1370 = vpop.permute.xlu0 %1369
    %1371 = vrot.lane.b32.xlu0 %v1365, 109
    %v1372 = vpop.permute.xlu0 %1371
    %1373 = vrot.lane.b32.xlu0 %v1366, 109
    %v1374 = vpop.permute.xlu0 %1373
    %v1375 = vsel %vm262, %v1368, %v1370
    %v1376 = vsel %vm262, %v1370, %v1372
    %v1377 = vsel %vm262, %v1372, %v1374
    %v1382 = vadd.f32 %v1316, %v1375
    %v1383 = vadd.f32 %v1317, %v1376
    %v1384 = vadd.f32 %v1318, %v1377
    %v1385 = vadd.f32 %v1319, %v1374
    %s1386 = sld [smem:[#allocation2 + $0x3a]]
    %v1387 = vstv %s1386
    %v1388 = vmul.f32 %v1387, %v39
    %v1389 = vmul.f32 %v1387, %v40
    %v1390 = vmul.f32 %v1387, %v41
    %v1391 = vmul.f32 %v1387, %v42
    %v1396 = vrot.slane %v1388, 2
    %v1397 = vrot.slane %v1389, 2
    %v1398 = vrot.slane %v1390, 2
    %v1399 = vrot.slane %v1391, 2
    %1400 = vrot.lane.b32.xlu0 %v1396, 109
    %v1401 = vpop.permute.xlu0 %1400
    %1402 = vrot.lane.b32.xlu0 %v1397, 109
    %v1403 = vpop.permute.xlu0 %1402
    %1404 = vrot.lane.b32.xlu0 %v1398, 109
    %v1405 = vpop.permute.xlu0 %1404
    %1406 = vrot.lane.b32.xlu0 %v1399, 109
    %v1407 = vpop.permute.xlu0 %1406
    %v1408 = vsel %vm262, %v1401, %v1403
    %v1409 = vsel %vm262, %v1403, %v1405
    %v1410 = vsel %vm262, %v1405, %v1407
    %v1415 = vadd.f32 %v1349, %v1408
    %v1416 = vadd.f32 %v1350, %v1409
    %v1417 = vadd.f32 %v1351, %v1410
    %v1418 = vadd.f32 %v1352, %v1407
    %s1419 = sld [smem:[#allocation2 + $0x17]]
    %v1420 = vstv %s1419
    %v1421 = vmul.f32 %v1420, %v39
    %v1422 = vmul.f32 %v1420, %v40
    %v1423 = vmul.f32 %v1420, %v41
    %v1424 = vmul.f32 %v1420, %v42
    %v1429 = vrot.slane %v1421, 2
    %v1430 = vrot.slane %v1422, 2
    %v1431 = vrot.slane %v1423, 2
    %v1432 = vrot.slane %v1424, 2
    %1433 = vrot.lane.b32.xlu0 %v1429, 108
    %v1434 = vpop.permute.xlu0 %1433
    %1435 = vrot.lane.b32.xlu0 %v1430, 108
    %v1436 = vpop.permute.xlu0 %1435
    %1437 = vrot.lane.b32.xlu0 %v1431, 108
    %v1438 = vpop.permute.xlu0 %1437
    %1439 = vrot.lane.b32.xlu0 %v1432, 108
    %v1440 = vpop.permute.xlu0 %1439
    %v1441 = vsel %vm321, %v1434, %v1436
    %v1442 = vsel %vm321, %v1436, %v1438
    %v1443 = vsel %vm321, %v1438, %v1440
    %v1448 = vadd.f32 %v1382, %v1441
    %v1449 = vadd.f32 %v1383, %v1442
    %v1450 = vadd.f32 %v1384, %v1443
    %v1451 = vadd.f32 %v1385, %v1440
    %s1452 = sld [smem:[#allocation2 + $0x3b]]
    %v1453 = vstv %s1452
    %v1454 = vmul.f32 %v1453, %v39
    %v1455 = vmul.f32 %v1453, %v40
    %v1456 = vmul.f32 %v1453, %v41
    %v1457 = vmul.f32 %v1453, %v42
    %v1462 = vrot.slane %v1454, 2
    %v1463 = vrot.slane %v1455, 2
    %v1464 = vrot.slane %v1456, 2
    %v1465 = vrot.slane %v1457, 2
    %1466 = vrot.lane.b32.xlu0 %v1462, 108
    %v1467 = vpop.permute.xlu0 %1466
    %1468 = vrot.lane.b32.xlu0 %v1463, 108
    %v1469 = vpop.permute.xlu0 %1468
    %1470 = vrot.lane.b32.xlu0 %v1464, 108
    %v1471 = vpop.permute.xlu0 %1470
    %1472 = vrot.lane.b32.xlu0 %v1465, 108
    %v1473 = vpop.permute.xlu0 %1472
    %v1474 = vsel %vm321, %v1467, %v1469
    %v1475 = vsel %vm321, %v1469, %v1471
    %v1476 = vsel %vm321, %v1471, %v1473
    %v1481 = vadd.f32 %v1415, %v1474
    %v1482 = vadd.f32 %v1416, %v1475
    %v1483 = vadd.f32 %v1417, %v1476
    %v1484 = vadd.f32 %v1418, %v1473
    %s1485 = sld [smem:[#allocation2 + $0x18]]
    %v1486 = vstv %s1485
    %v1487 = vmul.f32 %v1486, %v39
    %v1488 = vmul.f32 %v1486, %v40
    %v1489 = vmul.f32 %v1486, %v41
    %v1490 = vmul.f32 %v1486, %v42
    %v1495 = vrot.slane %v1487, 2
    %v1496 = vrot.slane %v1488, 2
    %v1497 = vrot.slane %v1489, 2
    %v1498 = vrot.slane %v1490, 2
    %1499 = vrot.lane.b32.xlu0 %v1495, 92
    %v1500 = vpop.permute.xlu0 %1499
    %1501 = vrot.lane.b32.xlu0 %v1496, 92
    %v1502 = vpop.permute.xlu0 %1501
    %1503 = vrot.lane.b32.xlu0 %v1497, 92
    %v1504 = vpop.permute.xlu0 %1503
    %1505 = vrot.lane.b32.xlu0 %v1498, 92
    %v1506 = vpop.permute.xlu0 %1505
    %v1507 = vsel %vm380, %v1500, %v1502
    %v1508 = vsel %vm380, %v1502, %v1504
    %v1509 = vsel %vm380, %v1504, %v1506
    %v1514 = vadd.f32 %v1448, %v1507
    %v1515 = vadd.f32 %v1449, %v1508
    %v1516 = vadd.f32 %v1450, %v1509
    %v1517 = vadd.f32 %v1451, %v1506
    %s1518 = sld [smem:[#allocation2 + $0x3c]]
    %v1519 = vstv %s1518
    %v1520 = vmul.f32 %v1519, %v39
    %v1521 = vmul.f32 %v1519, %v40
    %v1522 = vmul.f32 %v1519, %v41
    %v1523 = vmul.f32 %v1519, %v42
    %v1528 = vrot.slane %v1520, 2
    %v1529 = vrot.slane %v1521, 2
    %v1530 = vrot.slane %v1522, 2
    %v1531 = vrot.slane %v1523, 2
    %1532 = vrot.lane.b32.xlu0 %v1528, 92
    %v1533 = vpop.permute.xlu0 %1532
    %1534 = vrot.lane.b32.xlu0 %v1529, 92
    %v1535 = vpop.permute.xlu0 %1534
    %1536 = vrot.lane.b32.xlu0 %v1530, 92
    %v1537 = vpop.permute.xlu0 %1536
    %1538 = vrot.lane.b32.xlu0 %v1531, 92
    %v1539 = vpop.permute.xlu0 %1538
    %v1540 = vsel %vm380, %v1533, %v1535
    %v1541 = vsel %vm380, %v1535, %v1537
    %v1542 = vsel %vm380, %v1537, %v1539
    %v1547 = vadd.f32 %v1481, %v1540
    %v1548 = vadd.f32 %v1482, %v1541
    %v1549 = vadd.f32 %v1483, %v1542
    %v1550 = vadd.f32 %v1484, %v1539
    %s1551 = sld [smem:[#allocation2 + $0x19]]
    %v1552 = vstv %s1551
    %v1553 = vmul.f32 %v1552, %v39
    %v1554 = vmul.f32 %v1552, %v40
    %v1555 = vmul.f32 %v1552, %v41
    %v1556 = vmul.f32 %v1552, %v42
    %v1561 = vrot.slane %v1553, 2
    %v1562 = vrot.slane %v1554, 2
    %v1563 = vrot.slane %v1555, 2
    %v1564 = vrot.slane %v1556, 2
    %1565 = vrot.lane.b32.xlu0 %v1561, 91
    %v1566 = vpop.permute.xlu0 %1565
    %1567 = vrot.lane.b32.xlu0 %v1562, 91
    %v1568 = vpop.permute.xlu0 %1567
    %1569 = vrot.lane.b32.xlu0 %v1563, 91
    %v1570 = vpop.permute.xlu0 %1569
    %1571 = vrot.lane.b32.xlu0 %v1564, 91
    %v1572 = vpop.permute.xlu0 %1571
    %v1573 = vsel %vm439, %v1566, %v1568
    %v1574 = vsel %vm439, %v1568, %v1570
    %v1575 = vsel %vm439, %v1570, %v1572
    %v1580 = vadd.f32 %v1514, %v1573
    %v1581 = vadd.f32 %v1515, %v1574
    %v1582 = vadd.f32 %v1516, %v1575
    %v1583 = vadd.f32 %v1517, %v1572
    %s1584 = sld [smem:[#allocation2 + $0x3d]]
    %v1585 = vstv %s1584
    %v1586 = vmul.f32 %v1585, %v39
    %v1587 = vmul.f32 %v1585, %v40
    %v1588 = vmul.f32 %v1585, %v41
    %v1589 = vmul.f32 %v1585, %v42
    %v1594 = vrot.slane %v1586, 2
    %v1595 = vrot.slane %v1587, 2
    %v1596 = vrot.slane %v1588, 2
    %v1597 = vrot.slane %v1589, 2
    %1598 = vrot.lane.b32.xlu0 %v1594, 91
    %v1599 = vpop.permute.xlu0 %1598
    %1600 = vrot.lane.b32.xlu0 %v1595, 91
    %v1601 = vpop.permute.xlu0 %1600
    %1602 = vrot.lane.b32.xlu0 %v1596, 91
    %v1603 = vpop.permute.xlu0 %1602
    %1604 = vrot.lane.b32.xlu0 %v1597, 91
    %v1605 = vpop.permute.xlu0 %1604
    %v1606 = vsel %vm439, %v1599, %v1601
    %v1607 = vsel %vm439, %v1601, %v1603
    %v1608 = vsel %vm439, %v1603, %v1605
    %v1613 = vadd.f32 %v1547, %v1606
    %v1614 = vadd.f32 %v1548, %v1607
    %v1615 = vadd.f32 %v1549, %v1608
    %v1616 = vadd.f32 %v1550, %v1605
    %s1617 = sld [smem:[#allocation2 + $0x1a]]
    %v1618 = vstv %s1617
    %v1619 = vmul.f32 %v1618, %v39
    %v1620 = vmul.f32 %v1618, %v40
    %v1621 = vmul.f32 %v1618, %v41
    %v1622 = vmul.f32 %v1618, %v42
    %v1627 = vrot.slane %v1619, 2
    %v1628 = vrot.slane %v1620, 2
    %v1629 = vrot.slane %v1621, 2
    %v1630 = vrot.slane %v1622, 2
    %1631 = vrot.lane.b32.xlu0 %v1627, 90
    %v1632 = vpop.permute.xlu0 %1631
    %1633 = vrot.lane.b32.xlu0 %v1628, 90
    %v1634 = vpop.permute.xlu0 %1633
    %1635 = vrot.lane.b32.xlu0 %v1629, 90
    %v1636 = vpop.permute.xlu0 %1635
    %1637 = vrot.lane.b32.xlu0 %v1630, 90
    %v1638 = vpop.permute.xlu0 %1637
    %v1639 = vsel %vm498, %v1632, %v1634
    %v1640 = vsel %vm498, %v1634, %v1636
    %v1641 = vsel %vm498, %v1636, %v1638
    %v1646 = vadd.f32 %v1580, %v1639
    %v1647 = vadd.f32 %v1581, %v1640
    %v1648 = vadd.f32 %v1582, %v1641
    %v1649 = vadd.f32 %v1583, %v1638
    %s1650 = sld [smem:[#allocation2 + $0x3e]]
    %v1651 = vstv %s1650
    %v1652 = vmul.f32 %v1651, %v39
    %v1653 = vmul.f32 %v1651, %v40
    %v1654 = vmul.f32 %v1651, %v41
    %v1655 = vmul.f32 %v1651, %v42
    %v1660 = vrot.slane %v1652, 2
    %v1661 = vrot.slane %v1653, 2
    %v1662 = vrot.slane %v1654, 2
    %v1663 = vrot.slane %v1655, 2
    %1664 = vrot.lane.b32.xlu0 %v1660, 90
    %v1665 = vpop.permute.xlu0 %1664
    %1666 = vrot.lane.b32.xlu0 %v1661, 90
    %v1667 = vpop.permute.xlu0 %1666
    %1668 = vrot.lane.b32.xlu0 %v1662, 90
    %v1669 = vpop.permute.xlu0 %1668
    %1670 = vrot.lane.b32.xlu0 %v1663, 90
    %v1671 = vpop.permute.xlu0 %1670
    %v1672 = vsel %vm498, %v1665, %v1667
    %v1673 = vsel %vm498, %v1667, %v1669
    %v1674 = vsel %vm498, %v1669, %v1671
    %v1679 = vadd.f32 %v1613, %v1672
    %v1680 = vadd.f32 %v1614, %v1673
    %v1681 = vadd.f32 %v1615, %v1674
    %v1682 = vadd.f32 %v1616, %v1671
    %s1683 = sld [smem:[#allocation2 + $0x1b]]
    %v1684 = vstv %s1683
    %v1685 = vmul.f32 %v1684, %v39
    %v1686 = vmul.f32 %v1684, %v40
    %v1687 = vmul.f32 %v1684, %v41
    %v1688 = vmul.f32 %v1684, %v42
    %v1693 = vrot.slane %v1685, 3
    %v1694 = vrot.slane %v1686, 3
    %v1695 = vrot.slane %v1687, 3
    %v1696 = vrot.slane %v1688, 3
    %v1701 = vadd.f32 %v1646, %v1693
    %v1702 = vadd.f32 %v1647, %v1694
    %v1703 = vadd.f32 %v1648, %v1695
    %v1704 = vadd.f32 %v1649, %v1696
    %s1705 = sld [smem:[#allocation2 + $0x3f]]
    %v1706 = vstv %s1705
    %v1707 = vmul.f32 %v1706, %v39
    %v1708 = vmul.f32 %v1706, %v40
    %v1709 = vmul.f32 %v1706, %v41
    %v1710 = vmul.f32 %v1706, %v42
    %v1715 = vrot.slane %v1707, 3
    %v1716 = vrot.slane %v1708, 3
    %v1717 = vrot.slane %v1709, 3
    %v1718 = vrot.slane %v1710, 3
    %v1723 = vadd.f32 %v1679, %v1715
    %v1724 = vadd.f32 %v1680, %v1716
    %v1725 = vadd.f32 %v1681, %v1717
    %v1726 = vadd.f32 %v1682, %v1718
    %s1727 = sld [smem:[#allocation2 + $0x1c]]
    %v1728 = vstv %s1727
    %v1729 = vmul.f32 %v1728, %v39
    %v1730 = vmul.f32 %v1728, %v40
    %v1731 = vmul.f32 %v1728, %v41
    %v1732 = vmul.f32 %v1728, %v42
    %v1737 = vrot.slane %v1729, 3
    %v1738 = vrot.slane %v1730, 3
    %v1739 = vrot.slane %v1731, 3
    %v1740 = vrot.slane %v1732, 3
    %1741 = vrot.lane.b32.xlu0 %v1737, 127
    %v1742 = vpop.permute.xlu0 %1741
    %1743 = vrot.lane.b32.xlu0 %v1738, 127
    %v1744 = vpop.permute.xlu0 %1743
    %1745 = vrot.lane.b32.xlu0 %v1739, 127
    %v1746 = vpop.permute.xlu0 %1745
    %1747 = vrot.lane.b32.xlu0 %v1740, 127
    %v1748 = vpop.permute.xlu0 %1747
    %v1749 = vsel %vm85, %v1742, %v1744
    %v1750 = vsel %vm85, %v1744, %v1746
    %v1751 = vsel %vm85, %v1746, %v1748
    %v1756 = vadd.f32 %v1701, %v1749
    %v1757 = vadd.f32 %v1702, %v1750
    %v1758 = vadd.f32 %v1703, %v1751
    %v1759 = vadd.f32 %v1704, %v1748
    %s1760 = sld [smem:[#allocation2 + $0x40]]
    %v1761 = vstv %s1760
    %v1762 = vmul.f32 %v1761, %v39
    %v1763 = vmul.f32 %v1761, %v40
    %v1764 = vmul.f32 %v1761, %v41
    %v1765 = vmul.f32 %v1761, %v42
    %v1770 = vrot.slane %v1762, 3
    %v1771 = vrot.slane %v1763, 3
    %v1772 = vrot.slane %v1764, 3
    %v1773 = vrot.slane %v1765, 3
    %1774 = vrot.lane.b32.xlu0 %v1770, 127
    %v1775 = vpop.permute.xlu0 %1774
    %1776 = vrot.lane.b32.xlu0 %v1771, 127
    %v1777 = vpop.permute.xlu0 %1776
    %1778 = vrot.lane.b32.xlu0 %v1772, 127
    %v1779 = vpop.permute.xlu0 %1778
    %1780 = vrot.lane.b32.xlu0 %v1773, 127
    %v1781 = vpop.permute.xlu0 %1780
    %v1782 = vsel %vm85, %v1775, %v1777
    %v1783 = vsel %vm85, %v1777, %v1779
    %v1784 = vsel %vm85, %v1779, %v1781
    %v1789 = vadd.f32 %v1723, %v1782
    %v1790 = vadd.f32 %v1724, %v1783
    %v1791 = vadd.f32 %v1725, %v1784
    %v1792 = vadd.f32 %v1726, %v1781
    %s1793 = sld [smem:[#allocation2 + $0x1d]]
    %v1794 = vstv %s1793
    %v1795 = vmul.f32 %v1794, %v39
    %v1796 = vmul.f32 %v1794, %v40
    %v1797 = vmul.f32 %v1794, %v41
    %v1798 = vmul.f32 %v1794, %v42
    %v1803 = vrot.slane %v1795, 3
    %v1804 = vrot.slane %v1796, 3
    %v1805 = vrot.slane %v1797, 3
    %v1806 = vrot.slane %v1798, 3
    %1807 = vrot.lane.b32.xlu0 %v1803, 126
    %v1808 = vpop.permute.xlu0 %1807
    %1809 = vrot.lane.b32.xlu0 %v1804, 126
    %v1810 = vpop.permute.xlu0 %1809
    %1811 = vrot.lane.b32.xlu0 %v1805, 126
    %v1812 = vpop.permute.xlu0 %1811
    %1813 = vrot.lane.b32.xlu0 %v1806, 126
    %v1814 = vpop.permute.xlu0 %1813
    %v1815 = vsel %vm144, %v1808, %v1810
    %v1816 = vsel %vm144, %v1810, %v1812
    %v1817 = vsel %vm144, %v1812, %v1814
    %v1822 = vadd.f32 %v1756, %v1815
    %v1823 = vadd.f32 %v1757, %v1816
    %v1824 = vadd.f32 %v1758, %v1817
    %v1825 = vadd.f32 %v1759, %v1814
    %s1826 = sld [smem:[#allocation2 + $0x41]]
    %v1827 = vstv %s1826
    %v1828 = vmul.f32 %v1827, %v39
    %v1829 = vmul.f32 %v1827, %v40
    %v1830 = vmul.f32 %v1827, %v41
    %v1831 = vmul.f32 %v1827, %v42
    %v1836 = vrot.slane %v1828, 3
    %v1837 = vrot.slane %v1829, 3
    %v1838 = vrot.slane %v1830, 3
    %v1839 = vrot.slane %v1831, 3
    %1840 = vrot.lane.b32.xlu0 %v1836, 126
    %v1841 = vpop.permute.xlu0 %1840
    %1842 = vrot.lane.b32.xlu0 %v1837, 126
    %v1843 = vpop.permute.xlu0 %1842
    %1844 = vrot.lane.b32.xlu0 %v1838, 126
    %v1845 = vpop.permute.xlu0 %1844
    %1846 = vrot.lane.b32.xlu0 %v1839, 126
    %v1847 = vpop.permute.xlu0 %1846
    %v1848 = vsel %vm144, %v1841, %v1843
    %v1849 = vsel %vm144, %v1843, %v1845
    %v1850 = vsel %vm144, %v1845, %v1847
    %v1855 = vadd.f32 %v1789, %v1848
    %v1856 = vadd.f32 %v1790, %v1849
    %v1857 = vadd.f32 %v1791, %v1850
    %v1858 = vadd.f32 %v1792, %v1847
    %s1859 = sld [smem:[#allocation2 + $0x1e]]
    %v1860 = vstv %s1859
    %v1861 = vmul.f32 %v1860, %v39
    %v1862 = vmul.f32 %v1860, %v40
    %v1863 = vmul.f32 %v1860, %v41
    %v1864 = vmul.f32 %v1860, %v42
    %v1869 = vrot.slane %v1861, 3
    %v1870 = vrot.slane %v1862, 3
    %v1871 = vrot.slane %v1863, 3
    %v1872 = vrot.slane %v1864, 3
    %1873 = vrot.lane.b32.xlu0 %v1869, 110
    %v1874 = vpop.permute.xlu0 %1873
    %1875 = vrot.lane.b32.xlu0 %v1870, 110
    %v1876 = vpop.permute.xlu0 %1875
    %1877 = vrot.lane.b32.xlu0 %v1871, 110
    %v1878 = vpop.permute.xlu0 %1877
    %1879 = vrot.lane.b32.xlu0 %v1872, 110
    %v1880 = vpop.permute.xlu0 %1879
    %v1881 = vsel %vm203, %v1874, %v1876
    %v1882 = vsel %vm203, %v1876, %v1878
    %v1883 = vsel %vm203, %v1878, %v1880
    %v1888 = vadd.f32 %v1822, %v1881
    %v1889 = vadd.f32 %v1823, %v1882
    %v1890 = vadd.f32 %v1824, %v1883
    %v1891 = vadd.f32 %v1825, %v1880
    %s1892 = sld [smem:[#allocation2 + $0x42]]
    %v1893 = vstv %s1892
    %v1894 = vmul.f32 %v1893, %v39
    %v1895 = vmul.f32 %v1893, %v40
    %v1896 = vmul.f32 %v1893, %v41
    %v1897 = vmul.f32 %v1893, %v42
    %v1902 = vrot.slane %v1894, 3
    %v1903 = vrot.slane %v1895, 3
    %v1904 = vrot.slane %v1896, 3
    %v1905 = vrot.slane %v1897, 3
    %1906 = vrot.lane.b32.xlu0 %v1902, 110
    %v1907 = vpop.permute.xlu0 %1906
    %1908 = vrot.lane.b32.xlu0 %v1903, 110
    %v1909 = vpop.permute.xlu0 %1908
    %1910 = vrot.lane.b32.xlu0 %v1904, 110
    %v1911 = vpop.permute.xlu0 %1910
    %1912 = vrot.lane.b32.xlu0 %v1905, 110
    %v1913 = vpop.permute.xlu0 %1912
    %v1914 = vsel %vm203, %v1907, %v1909
    %v1915 = vsel %vm203, %v1909, %v1911
    %v1916 = vsel %vm203, %v1911, %v1913
    %v1921 = vadd.f32 %v1855, %v1914
    %v1922 = vadd.f32 %v1856, %v1915
    %v1923 = vadd.f32 %v1857, %v1916
    %v1924 = vadd.f32 %v1858, %v1913
    %s1925 = sld [smem:[#allocation2 + $0x1f]]
    %v1926 = vstv %s1925
    %v1927 = vmul.f32 %v1926, %v39
    %v1928 = vmul.f32 %v1926, %v40
    %v1929 = vmul.f32 %v1926, %v41
    %v1930 = vmul.f32 %v1926, %v42
    %v1935 = vrot.slane %v1927, 3
    %v1936 = vrot.slane %v1928, 3
    %v1937 = vrot.slane %v1929, 3
    %v1938 = vrot.slane %v1930, 3
    %1939 = vrot.lane.b32.xlu0 %v1935, 109
    %v1940 = vpop.permute.xlu0 %1939
    %1941 = vrot.lane.b32.xlu0 %v1936, 109
    %v1942 = vpop.permute.xlu0 %1941
    %1943 = vrot.lane.b32.xlu0 %v1937, 109
    %v1944 = vpop.permute.xlu0 %1943
    %1945 = vrot.lane.b32.xlu0 %v1938, 109
    %v1946 = vpop.permute.xlu0 %1945
    %v1947 = vsel %vm262, %v1940, %v1942
    %v1948 = vsel %vm262, %v1942, %v1944
    %v1949 = vsel %vm262, %v1944, %v1946
    %v1954 = vadd.f32 %v1888, %v1947
    %v1955 = vadd.f32 %v1889, %v1948
    %v1956 = vadd.f32 %v1890, %v1949
    %v1957 = vadd.f32 %v1891, %v1946
    %s1958 = sld [smem:[#allocation2 + $0x43]]
    %v1959 = vstv %s1958
    %v1960 = vmul.f32 %v1959, %v39
    %v1961 = vmul.f32 %v1959, %v40
    %v1962 = vmul.f32 %v1959, %v41
    %v1963 = vmul.f32 %v1959, %v42
    %v1968 = vrot.slane %v1960, 3
    %v1969 = vrot.slane %v1961, 3
    %v1970 = vrot.slane %v1962, 3
    %v1971 = vrot.slane %v1963, 3
    %1972 = vrot.lane.b32.xlu0 %v1968, 109
    %v1973 = vpop.permute.xlu0 %1972
    %1974 = vrot.lane.b32.xlu0 %v1969, 109
    %v1975 = vpop.permute.xlu0 %1974
    %1976 = vrot.lane.b32.xlu0 %v1970, 109
    %v1977 = vpop.permute.xlu0 %1976
    %1978 = vrot.lane.b32.xlu0 %v1971, 109
    %v1979 = vpop.permute.xlu0 %1978
    %v1980 = vsel %vm262, %v1973, %v1975
    %v1981 = vsel %vm262, %v1975, %v1977
    %v1982 = vsel %vm262, %v1977, %v1979
    %v1987 = vadd.f32 %v1921, %v1980
    %v1988 = vadd.f32 %v1922, %v1981
    %v1989 = vadd.f32 %v1923, %v1982
    %v1990 = vadd.f32 %v1924, %v1979
    %s1991 = sld [smem:[#allocation2 + $0x20]]
    %v1992 = vstv %s1991
    %v1993 = vmul.f32 %v1992, %v39
    %v1994 = vmul.f32 %v1992, %v40
    %v1995 = vmul.f32 %v1992, %v41
    %v1996 = vmul.f32 %v1992, %v42
    %v2001 = vrot.slane %v1993, 3
    %v2002 = vrot.slane %v1994, 3
    %v2003 = vrot.slane %v1995, 3
    %v2004 = vrot.slane %v1996, 3
    %2005 = vrot.lane.b32.xlu0 %v2001, 108
    %v2006 = vpop.permute.xlu0 %2005
    %2007 = vrot.lane.b32.xlu0 %v2002, 108
    %v2008 = vpop.permute.xlu0 %2007
    %2009 = vrot.lane.b32.xlu0 %v2003, 108
    %v2010 = vpop.permute.xlu0 %2009
    %2011 = vrot.lane.b32.xlu0 %v2004, 108
    %v2012 = vpop.permute.xlu0 %2011
    %v2013 = vsel %vm321, %v2006, %v2008
    %v2014 = vsel %vm321, %v2008, %v2010
    %v2015 = vsel %vm321, %v2010, %v2012
    %v2020 = vadd.f32 %v1954, %v2013
    %v2021 = vadd.f32 %v1955, %v2014
    %v2022 = vadd.f32 %v1956, %v2015
    %v2023 = vadd.f32 %v1957, %v2012
    %s2024 = sld [smem:[#allocation2 + $0x44]]
    %v2025 = vstv %s2024
    %v2026 = vmul.f32 %v2025, %v39
    %v2027 = vmul.f32 %v2025, %v40
    %v2028 = vmul.f32 %v2025, %v41
    %v2029 = vmul.f32 %v2025, %v42
    %v2034 = vrot.slane %v2026, 3
    %v2035 = vrot.slane %v2027, 3
    %v2036 = vrot.slane %v2028, 3
    %v2037 = vrot.slane %v2029, 3
    %2038 = vrot.lane.b32.xlu0 %v2034, 108
    %v2039 = vpop.permute.xlu0 %2038
    %2040 = vrot.lane.b32.xlu0 %v2035, 108
    %v2041 = vpop.permute.xlu0 %2040
    %2042 = vrot.lane.b32.xlu0 %v2036, 108
    %v2043 = vpop.permute.xlu0 %2042
    %2044 = vrot.lane.b32.xlu0 %v2037, 108
    %v2045 = vpop.permute.xlu0 %2044
    %v2046 = vsel %vm321, %v2039, %v2041
    %v2047 = vsel %vm321, %v2041, %v2043
    %v2048 = vsel %vm321, %v2043, %v2045
    %v2053 = vadd.f32 %v1987, %v2046
    %v2054 = vadd.f32 %v1988, %v2047
    %v2055 = vadd.f32 %v1989, %v2048
    %v2056 = vadd.f32 %v1990, %v2045
    %s2057 = sld [smem:[#allocation2 + $0x21]]
    %v2058 = vstv %s2057
    %v2059 = vmul.f32 %v2058, %v39
    %v2060 = vmul.f32 %v2058, %v40
    %v2061 = vmul.f32 %v2058, %v41
    %v2062 = vmul.f32 %v2058, %v42
    %v2067 = vrot.slane %v2059, 3
    %v2068 = vrot.slane %v2060, 3
    %v2069 = vrot.slane %v2061, 3
    %v2070 = vrot.slane %v2062, 3
    %2071 = vrot.lane.b32.xlu0 %v2067, 92
    %v2072 = vpop.permute.xlu0 %2071
    %2073 = vrot.lane.b32.xlu0 %v2068, 92
    %v2074 = vpop.permute.xlu0 %2073
    %2075 = vrot.lane.b32.xlu0 %v2069, 92
    %v2076 = vpop.permute.xlu0 %2075
    %2077 = vrot.lane.b32.xlu0 %v2070, 92
    %v2078 = vpop.permute.xlu0 %2077
    %v2079 = vsel %vm380, %v2072, %v2074
    %v2080 = vsel %vm380, %v2074, %v2076
    %v2081 = vsel %vm380, %v2076, %v2078
    %v2086 = vadd.f32 %v2020, %v2079
    %v2087 = vadd.f32 %v2021, %v2080
    %v2088 = vadd.f32 %v2022, %v2081
    %v2089 = vadd.f32 %v2023, %v2078
    %s2090 = sld [smem:[#allocation2 + $0x45]]
    %v2091 = vstv %s2090
    %v2092 = vmul.f32 %v2091, %v39
    %v2093 = vmul.f32 %v2091, %v40
    %v2094 = vmul.f32 %v2091, %v41
    %v2095 = vmul.f32 %v2091, %v42
    %v2100 = vrot.slane %v2092, 3
    %v2101 = vrot.slane %v2093, 3
    %v2102 = vrot.slane %v2094, 3
    %v2103 = vrot.slane %v2095, 3
    %2104 = vrot.lane.b32.xlu0 %v2100, 92
    %v2105 = vpop.permute.xlu0 %2104
    %2106 = vrot.lane.b32.xlu0 %v2101, 92
    %v2107 = vpop.permute.xlu0 %2106
    %2108 = vrot.lane.b32.xlu0 %v2102, 92
    %v2109 = vpop.permute.xlu0 %2108
    %2110 = vrot.lane.b32.xlu0 %v2103, 92
    %v2111 = vpop.permute.xlu0 %2110
    %v2112 = vsel %vm380, %v2105, %v2107
    %v2113 = vsel %vm380, %v2107, %v2109
    %v2114 = vsel %vm380, %v2109, %v2111
    %v2119 = vadd.f32 %v2053, %v2112
    %v2120 = vadd.f32 %v2054, %v2113
    %v2121 = vadd.f32 %v2055, %v2114
    %v2122 = vadd.f32 %v2056, %v2111
    %s2123 = sld [smem:[#allocation2 + $0x22]]
    %v2124 = vstv %s2123
    %v2125 = vmul.f32 %v2124, %v39
    %v2126 = vmul.f32 %v2124, %v40
    %v2127 = vmul.f32 %v2124, %v41
    %v2128 = vmul.f32 %v2124, %v42
    %v2133 = vrot.slane %v2125, 3
    %v2134 = vrot.slane %v2126, 3
    %v2135 = vrot.slane %v2127, 3
    %v2136 = vrot.slane %v2128, 3
    %2137 = vrot.lane.b32.xlu0 %v2133, 91
    %v2138 = vpop.permute.xlu0 %2137
    %2139 = vrot.lane.b32.xlu0 %v2134, 91
    %v2140 = vpop.permute.xlu0 %2139
    %2141 = vrot.lane.b32.xlu0 %v2135, 91
    %v2142 = vpop.permute.xlu0 %2141
    %2143 = vrot.lane.b32.xlu0 %v2136, 91
    %v2144 = vpop.permute.xlu0 %2143
    %v2145 = vsel %vm439, %v2138, %v2140
    %v2146 = vsel %vm439, %v2140, %v2142
    %v2147 = vsel %vm439, %v2142, %v2144
    %v2152 = vadd.f32 %v2086, %v2145
    %v2153 = vadd.f32 %v2087, %v2146
    %v2154 = vadd.f32 %v2088, %v2147
    %v2155 = vadd.f32 %v2089, %v2144
    %s2156 = sld [smem:[#allocation2 + $0x46]]
    %v2157 = vstv %s2156
    %v2158 = vmul.f32 %v2157, %v39
    %v2159 = vmul.f32 %v2157, %v40
    %v2160 = vmul.f32 %v2157, %v41
    %v2161 = vmul.f32 %v2157, %v42
    %v2166 = vrot.slane %v2158, 3
    %v2167 = vrot.slane %v2159, 3
    %v2168 = vrot.slane %v2160, 3
    %v2169 = vrot.slane %v2161, 3
    %2170 = vrot.lane.b32.xlu0 %v2166, 91
    %v2171 = vpop.permute.xlu0 %2170
    %2172 = vrot.lane.b32.xlu0 %v2167, 91
    %v2173 = vpop.permute.xlu0 %2172
    %2174 = vrot.lane.b32.xlu0 %v2168, 91
    %v2175 = vpop.permute.xlu0 %2174
    %2176 = vrot.lane.b32.xlu0 %v2169, 91
    %v2177 = vpop.permute.xlu0 %2176
    %v2178 = vsel %vm439, %v2171, %v2173
    %v2179 = vsel %vm439, %v2173, %v2175
    %v2180 = vsel %vm439, %v2175, %v2177
    %v2185 = vadd.f32 %v2119, %v2178
    %v2186 = vadd.f32 %v2120, %v2179
    %v2187 = vadd.f32 %v2121, %v2180
    %v2188 = vadd.f32 %v2122, %v2177
    %s2189 = sld [smem:[#allocation2 + $0x23]]
    %v2190 = vstv %s2189
    %v2191 = vmul.f32 %v2190, %v39
    %v2192 = vmul.f32 %v2190, %v40
    %v2193 = vmul.f32 %v2190, %v41
    %v2194 = vmul.f32 %v2190, %v42
    %v2199 = vrot.slane %v2191, 3
    %v2200 = vrot.slane %v2192, 3
    %v2201 = vrot.slane %v2193, 3
    %v2202 = vrot.slane %v2194, 3
    %2203 = vrot.lane.b32.xlu0 %v2199, 90
    %v2204 = vpop.permute.xlu0 %2203
    %2205 = vrot.lane.b32.xlu0 %v2200, 90
    %v2206 = vpop.permute.xlu0 %2205
    %2207 = vrot.lane.b32.xlu0 %v2201, 90
    %v2208 = vpop.permute.xlu0 %2207
    %2209 = vrot.lane.b32.xlu0 %v2202, 90
    %v2210 = vpop.permute.xlu0 %2209
    %v2211 = vsel %vm498, %v2204, %v2206
    %v2212 = vsel %vm498, %v2206, %v2208
    %v2213 = vsel %vm498, %v2208, %v2210
    %v2218 = vadd.f32 %v2152, %v2211
    %v2219 = vadd.f32 %v2153, %v2212
    %v2220 = vadd.f32 %v2154, %v2213
    %v2221 = vadd.f32 %v2155, %v2210
    %s2222 = sld [smem:[#allocation2 + $0x47]]
    %v2223 = vstv %s2222
    %v2224 = vmul.f32 %v2223, %v39
    %v2225 = vmul.f32 %v2223, %v40
    %v2226 = vmul.f32 %v2223, %v41
    %v2227 = vmul.f32 %v2223, %v42
    %v2232 = vrot.slane %v2224, 3
    %v2233 = vrot.slane %v2225, 3
    %v2234 = vrot.slane %v2226, 3
    %v2235 = vrot.slane %v2227, 3
    %2236 = vrot.lane.b32.xlu0 %v2232, 90
    %v2237 = vpop.permute.xlu0 %2236
    %2238 = vrot.lane.b32.xlu0 %v2233, 90
    %v2239 = vpop.permute.xlu0 %2238
    %2240 = vrot.lane.b32.xlu0 %v2234, 90
    %v2241 = vpop.permute.xlu0 %2240
    %2242 = vrot.lane.b32.xlu0 %v2235, 90
    %v2243 = vpop.permute.xlu0 %2242
    %v2244 = vsel %vm498, %v2237, %v2239
    %v2245 = vsel %vm498, %v2239, %v2241
    %v2246 = vsel %vm498, %v2241, %v2243
    %v2251 = vadd.f32 %v2185, %v2244
    %v2252 = vadd.f32 %v2186, %v2245
    %v2253 = vadd.f32 %v2187, %v2246
    %v2254 = vadd.f32 %v2188, %v2243
    %v2259 = vrot.slane %v2251, 7
    %v2260 = vrot.slane %v2252, 7
    %v2261 = vrot.slane %v2253, 7
    %v2262 = vrot.slane %v2254, 7
    %v2271 = vrot.slane %v2218, 2
    %v2272 = vrot.slane %v2219, 2
    %v2273 = vrot.slane %v2220, 2
    %v2274 = vrot.slane %v2221, 2
    %v2279 = vrot.slane %v2251, 1
    %v2280 = vrot.slane %v2252, 1
    %v2281 = vrot.slane %v2253, 1
    %v2282 = vrot.slane %v2254, 1
    %vm2287 = vcmask 1040384
    %v2288 = vsel %vm2287, %v2218, %v2259
    %v2289 = vsel %vm2287, %v2219, %v2260
    %v2290 = vsel %vm2287, %v2220, %v2261
    %v2291 = vsel %vm2287, %v2221, %v2262
    %vm2292 = vcmask 1041408
    %v2293 = vsel %vm2292, %v2288, %v2271
    %v2294 = vsel %vm2292, %v2289, %v2272
    %v2295 = vsel %vm2292, %v2290, %v2273
    %v2296 = vsel %vm2292, %v2291, %v2274
    %vm2297 = vcmask 1042432
    %v2298 = vsel %vm2297, %v2293, %v2279
    %v2299 = vsel %vm2297, %v2294, %v2280
    %v2300 = vsel %vm2297, %v2295, %v2281
    %v2301 = vsel %vm2297, %v2296, %v2282
    %v2306 = vcombine.low %v2298, %v2299
    %v2307 = vcombine.low %v2300, %v2301
    %2308 = vrot.lane.b32.xlu0 %v2306, 111
    %v2309 = vpop.permute.xlu0 %2308
    %2310 = vrot.lane.b32.xlu0 %v2307, 111
    %v2311 = vpop.permute.xlu0 %2310
    %v2312 = vrot.slane %v2309, 4
    %v2313 = vrot.slane %v2311, 4
    %vm2314 = vcmask 1043456
    %v2315 = vsel %vm2314, %v2312, %v2313
    %vm2316 = vcmask 908288
    %v2317 = vsel %vm2316, %v2309, %v2315
    %v2318 = vsel %vm2316, %v2311, %v2313
    %2321 = vst [vmem:[%s3] sm:$0xff] %v2317
    %2322 = vst [vmem:[%s3 + $0x8] sm:$0xf] %v2318
    // Predicated region
    $region22: #{posenet_forward.1} parent=1 // pred_check
      _
    $region23: #{posenet_forward.1} parent=1 // pred_check_branch
      %2324 = sbr.rel (0) target = $region25
    $region24: #{posenet_forward.1} parent=1 // pred_region
      _
    $region25: #{posenet_forward.1} parent=1 // pred_fallthru
      _
    // Predicated region
    $region26: #{posenet_forward.1} parent=1 // pred_check
      _
    $region27: #{posenet_forward.1} parent=1 // pred_check_branch
      %2326 = sbr.rel (0) target = $region29
    $region28: #{posenet_forward.1} parent=1 // pred_region
      _
    $region29: #{posenet_forward.1} parent=1 // pred_fallthru
      _
    %2327 = vsyncpa [#allocation3], 1
    %2328 = vsyncpa [#allocation5], 1

</llo_original>
